<compile_context>
chip_gen: v7x
topology: tpu7x:2x2x1
jax: 0.10.0
libtpu: 0.0.40
codegen_flags: <defaults>
</compile_context>

<pallas_src>
import jax
import jax.numpy as jnp
from jax import lax
from jax.experimental import pallas as pl
from jax.experimental.pallas import tpu as pltpu

_BN_EPS = 1e-5


# ----------------------------------------------------------------------------
# In-kernel helpers (operate on [C, H*W] f32 values)
# ----------------------------------------------------------------------------
def _relu(x):
    return jnp.maximum(x, 0.0)


def _shift_flat(x, s, hw):
    """t[:, p] = x[:, p + s], zero-filled outside [0, hw)."""
    if s == 0:
        return x
    c = x.shape[0]
    z = jnp.zeros((c, abs(s)), x.dtype)
    if s > 0:
        return jnp.concatenate([x[:, s:], z], axis=1)
    return jnp.concatenate([z, x[:, :hw + s]], axis=1)


def _tap(x, dy, dx, h, w, masks):
    """Value of x (viewed as [C, h, w]) at (row+dy, col+dx), zero-padded outside the image."""
    hw = h * w
    t = _shift_flat(x, dy * w + dx, hw)
    if dx != 0:  # pure row shifts are handled exactly by the zero fill
        k = (dy + 1) * 3 + (dx + 1)
        t = t * masks[k:k + 1, :]
    return t


def _conv3x3(x, w_stk, b, h, w, masks):
    """3x3 stride-1 'same' conv as ONE stacked-K matmul.

    x: [Cin, h*w]; w_stk: [Cout, 9*Cin] (tap order ky*3+kx); b: [Cout, 1] or None.
    """
    taps = [_tap(x, dy, dx, h, w, masks) for dy in (-1, 0, 1) for dx in (-1, 0, 1)]
    t = jnp.concatenate(taps, axis=0)                      # [9*Cin, h*w]
    y = jnp.dot(w_stk, t, preferred_element_type=jnp.float32)
    return y if b is None else y + b


def _resblock(x, w1, b1, w2, b2, h, w, masks):
    """ResidualBlock with BatchNorm folded into (w, b):  relu(conv2(relu(conv1(x))) + x)."""
    y = _relu(_conv3x3(x, w1, b1, h, w, masks))
    y = _conv3x3(y, w2, b2, h, w, masks)
    return _relu(y + x)


# ----------------------------------------------------------------------------
# Kernel 1: down path  (stride-2 conv + ReLU + 2 residual blocks), one batch per grid step
# ----------------------------------------------------------------------------
def _make_down_kernel(cin, cmid, h2, w2):
    def kernel(xpp_ref, masks_ref, wd_ref, wr_ref, br_ref, o_ref):
        masks = masks_ref[...]
        xpp = xpp_ref[...].astype(jnp.float32)             # [4*cin, h2*w2]
        comps = [xpp[k * cin:(k + 1) * cin, :] for k in range(4)]  # ee, eo, oe, oo

        # stride-2 3x3 conv via polyphase decomposition: source pixel (2i+ky-1, 2j+kx-1)
        taps = []
        for ky in range(3):
            rpar = 0 if ky == 1 else 1          # 0 = even source rows, 1 = odd
            dy = -1 if ky == 0 else 0
            for kx in range(3):
                cpar = 0 if kx == 1 else 1
                dx = -1 if kx == 0 else 0
                taps.append(_tap(comps[rpar * 2 + cpar], dy, dx, h2, w2, masks))
        t = jnp.concatenate(taps, axis=0)                  # [9*cin, h2*w2]
        d = _relu(jnp.dot(wd_ref[...], t, preferred_element_type=jnp.float32))

        wr = wr_ref[...].astype(jnp.float32)               # [4*cmid, 9*cmid]
        br = br_ref[...].astype(jnp.float32)               # [4*cmid, 1]
        d = _resblock(d, wr[0 * cmid:1 * cmid], br[0 * cmid:1 * cmid],
                      wr[1 * cmid:2 * cmid], br[1 * cmid:2 * cmid], h2, w2, masks)
        d = _resblock(d, wr[2 * cmid:3 * cmid], br[2 * cmid:3 * cmid],
                      wr[3 * cmid:4 * cmid], br[3 * cmid:4 * cmid], h2, w2, masks)
        o_ref[...] = d.astype(o_ref.dtype)
    return kernel


# ----------------------------------------------------------------------------
# Kernel 2: up path  (upconv + BN + ReLU + 2 residual blocks + fused skip concat)
# ----------------------------------------------------------------------------
def _make_up_kernel(cx, cmid, cout, h, w):
    def kernel(x_ref, u_ref, masks_ref, wu_ref, bu_ref, wr_ref, br_ref, o_ref):
        masks = masks_ref[...]
        u = u_ref[...].astype(jnp.float32)                 # [cmid, h*w] (already upsampled)
        y = _relu(_conv3x3(u, wu_ref[...], bu_ref[...], h, w, masks))  # upconv + folded BN + ReLU

        wr = wr_ref[...].astype(jnp.float32)               # [4*cout, 9*cout]
        br = br_ref[...].astype(jnp.float32)               # [4*cout, 1]
        y = _resblock(y, wr[0 * cout:1 * cout], br[0 * cout:1 * cout],
                      wr[1 * cout:2 * cout], br[1 * cout:2 * cout], h, w, masks)
        y = _resblock(y, wr[2 * cout:3 * cout], br[2 * cout:3 * cout],
                      wr[3 * cout:4 * cout], br[3 * cout:4 * cout], h, w, masks)

        out = jnp.concatenate([x_ref[...].astype(jnp.float32), y], axis=0)  # torch.cat([x, up], 1)
        o_ref[...] = out.astype(o_ref.dtype)
    return kernel


# ----------------------------------------------------------------------------
# Host-side preparation helpers
# ----------------------------------------------------------------------------
def _stack_conv_w(w):
    """[Cout, Cin, 3, 3] -> [Cout, 9*Cin] with tap order ky*3+kx (matches the in-kernel taps)."""
    cout, cin = w.shape[0], w.shape[1]
    return jnp.transpose(w, (0, 2, 3, 1)).reshape(cout, 9 * cin)


def _fold_bn(w, bn, eps=_BN_EPS):
    """Fold inference-mode BatchNorm (gamma, beta, mean, var) into a bias-free conv weight."""
    g, b, m, v = bn
    s = g / jnp.sqrt(v + eps)
    return w * s[:, None, None, None], (b - m * s)


def _tap_masks(h, w):
    """[9, h*w] float validity masks for the 3x3 taps (dy, dx) in {-1,0,1}^2."""
    r = jnp.arange(h * w, dtype=jnp.int32) // w
    c = jnp.arange(h * w, dtype=jnp.int32) % w
    rows = []
    for dy in (-1, 0, 1):
        for dx in (-1, 0, 1):
            ok = (r + dy >= 0) & (r + dy < h) & (c + dx >= 0) & (c + dx < w)
            rows.append(ok.astype(jnp.float32))
    return jnp.stack(rows, axis=0)


def _prep_resblocks(rbs):
    """Stack the two conv weights/biases of each ResidualBlock (BN folded) into single arrays."""
    ws, bs = [], []
    for rb in rbs:
        w1, b1 = _fold_bn(rb["w1"], rb["bn1"])
        w2, b2 = _fold_bn(rb["w2"], rb["bn2"])
        ws += [_stack_conv_w(w1), _stack_conv_w(w2)]
        bs += [b1, b2]
    return jnp.concatenate(ws, axis=0), jnp.concatenate(bs, axis=0)[:, None]


# ----------------------------------------------------------------------------
# Forward pass
# ----------------------------------------------------------------------------
def res_unet_innermost_forward(params, x):
    """x: [B, input_nc, H, W] -> cat([x, model(x)], dim=1): [B, input_nc + outer_nc, H, W]."""
    B, cx, H, W = x.shape
    H2, W2 = H // 2, W // 2
    cmid = params["down_w"].shape[0]          # inner_nc
    cout = params["up_w"].shape[0]            # outer_nc
    dt = x.dtype

    # ---- fold BN, stack weights (host-side, once per call) ----
    wd = _stack_conv_w(params["down_w"])                       # [cmid, 9*cx]
    wr_d, br_d = _prep_resblocks(params["rb_down"])            # [4*cmid, 9*cmid], [4*cmid, 1]
    wu_raw, bu_raw = _fold_bn(params["up_w"], params["up_bn"])
    wu = _stack_conv_w(wu_raw)                                 # [cout, 9*cmid]
    bu = bu_raw[:, None]                                       # [cout, 1]
    wr_u, br_u = _prep_resblocks(params["rb_up"])              # [4*cout, 9*cout], [4*cout, 1]

    masks_lo = _tap_masks(H2, W2)                              # [9, H2*W2]
    masks_hi = _tap_masks(H, W)                                # [9, H*W]

    # ---- polyphase split of x for the stride-2 downconv (layout plumbing) ----
    xpp = jnp.concatenate(
        [x[:, :, 0::2, 0::2], x[:, :, 0::2, 1::2],
         x[:, :, 1::2, 0::2], x[:, :, 1::2, 1::2]],
        axis=1).reshape(B, 4 * cx, H2 * W2)

    full = lambda r, c: pl.BlockSpec((r, c), lambda i: (0, 0))

    # ---- kernel 1: full down path at H/2 x W/2 resolution ----
    d = pl.pallas_call(
        _make_down_kernel(cx, cmid, H2, W2),
        out_shape=jax.ShapeDtypeStruct((B, cmid, H2 * W2), dt),
        grid=(B,),
        in_specs=[
            pl.BlockSpec((None, 4 * cx, H2 * W2), lambda i: (i, 0, 0)),
            full(9, H2 * W2),
            full(cmid, 9 * cx),
            full(4 * cmid, 9 * cmid),
            full(4 * cmid, 1),
        ],
        out_specs=pl.BlockSpec((None, cmid, H2 * W2), lambda i: (i, 0, 0)),
        compiler_params=pltpu.CompilerParams(dimension_semantics=("parallel",)),
    )(xpp, masks_lo, wd, wr_d, br_d)

    # ---- nearest-neighbour 2x upsample between the two fused kernels ----
    u = d.reshape(B, cmid, H2, W2)
    u = jnp.repeat(jnp.repeat(u, 2, axis=2), 2, axis=3).reshape(B, cmid, H * W)
    x_flat = x.reshape(B, cx, H * W)

    # ---- kernel 2: full up path at H x W resolution + fused skip concat ----
    out = pl.pallas_call(
        _make_up_kernel(cx, cmid, cout, H, W),
        out_shape=jax.ShapeDtypeStruct((B, cx + cout, H * W), dt),
        grid=(B,),
        in_specs=[
            pl.BlockSpec((None, cx, H * W), lambda i: (i, 0, 0)),
            pl.BlockSpec((None, cmid, H * W), lambda i: (i, 0, 0)),
            full(9, H * W),
            full(cout, 9 * cmid),
            full(cout, 1),
            full(4 * cout, 9 * cout),
            full(4 * cout, 1),
        ],
        out_specs=pl.BlockSpec((None, cx + cout, H * W), lambda i: (i, 0, 0)),
        compiler_params=pltpu.CompilerParams(dimension_semantics=("parallel",)),
    )(x_flat, u, masks_hi, wu, bu, wr_u, br_u)

    return out.reshape(B, cx + cout, H, W)


# ----------------------------------------------------------------------------
# Parameter construction
# ----------------------------------------------------------------------------
def init_params(key, *, input_nc, inner_nc, outer_nc):
    def conv_w(k, co, ci):
        return jax.random.normal(k, (co, ci, 3, 3), jnp.float32) * (2.0 / (9 * ci)) ** 0.5

    def bn(k, c):
        k1, k2, k3, k4 = jax.random.split(k, 4)
        return (1.0 + 0.1 * jax.random.normal(k1, (c,), jnp.float32),   # gamma
                0.1 * jax.random.normal(k2, (c,), jnp.float32),         # beta
                0.1 * jax.random.normal(k3, (c,), jnp.float32),         # running mean
                jax.random.uniform(k4, (c,), jnp.float32, 0.5, 1.5))    # running var

    def resblock(k, c):
        ks = jax.random.split(k, 4)
        return {"w1": conv_w(ks[0], c, c), "bn1": bn(ks[1], c),
                "w2": conv_w(ks[2], c, c), "bn2": bn(ks[3], c)}

    ks = jax.random.split(key, 7)
    return {
        "down_w": conv_w(ks[0], inner_nc, input_nc),                    # downconv (no bias)
        "rb_down": [resblock(ks[1], inner_nc), resblock(ks[2], inner_nc)],
        "up_w": conv_w(ks[3], outer_nc, inner_nc),                      # upconv (no bias)
        "up_bn": bn(ks[4], outer_nc),
        "rb_up": [resblock(ks[5], outer_nc), resblock(ks[6], outer_nc)],
    }


# ----------------------------------------------------------------------------
# Pure-JAX reference (mirrors the PyTorch module semantics)
# ----------------------------------------------------------------------------
def _ref_conv(x, w, stride=1):
    return lax.conv_general_dilated(x, w, window_strides=(stride, stride),
                                    padding=((1, 1), (1, 1)),
                                    dimension_numbers=("NCHW", "OIHW", "NCHW"))


def _ref_bn(x, bn, eps=_BN_EPS):
    g, b, m, v = bn
    s = g / jnp.sqrt(v + eps)
    return x * s[None, :, None, None] + (b - m * s)[None, :, None, None]


def _ref_resblock(x, p):
    h = jnp.maximum(_ref_bn(_ref_conv(x, p["w1"]), p["bn1"]), 0.0)
    h = _ref_bn(_ref_conv(h, p["w2"]), p["bn2"])
    return jnp.maximum(h + x, 0.0)


def res_unet_innermost_forward_ref(params, x):
    d = jnp.maximum(_ref_conv(x, params["down_w"], stride=2), 0.0)
    d = _ref_resblock(d, params["rb_down"][0])
    d = _ref_resblock(d, params["rb_down"][1])
    u = jnp.repeat(jnp.repeat(d, 2, axis=2), 2, axis=3)
    u = jnp.maximum(_ref_bn(_ref_conv(u, params["up_w"]), params["up_bn"]), 0.0)
    u = _ref_resblock(u, params["rb_up"][0])
    u = _ref_resblock(u, params["rb_up"][1])
    return jnp.concatenate([x, u], axis=1)


if __name__ == "__main__":
    B, input_nc, H, W = 2, 4, 32, 32
    inner_nc, outer_nc = 8, 4          # innermost: input_nc defaults to outer_nc in the torch ctor

    key = jax.random.PRNGKey(0)
    kp, kx = jax.random.split(key)
    params = init_params(kp, input_nc=input_nc, inner_nc=inner_nc, outer_nc=outer_nc)
    x = jax.random.normal(kx, (B, input_nc, H, W), dtype=jnp.float32)

    out = jax.block_until_ready(res_unet_innermost_forward(params, x))
    ref = jax.block_until_ready(res_unet_innermost_forward_ref(params, x))

    assert out.shape == (B, input_nc + outer_nc, H, W), out.shape
    max_err = float(jnp.max(jnp.abs(out - ref)))
    assert jnp.allclose(out, ref, rtol=1e-2, atol=1e-2), max_err

    print("KERNEL_OK")
</pallas_src>

<mosaic_0001>
module attributes {stable_mosaic.version = 11 : i64} {
  func.func @kernel(%arg0: i32, %arg1: memref<1x16x256xf32, #tpu.memory_space<vmem>>, %arg2: memref<9x256xf32, #tpu.memory_space<vmem>>, %arg3: memref<8x36xf32, #tpu.memory_space<vmem>>, %arg4: memref<32x72xf32, #tpu.memory_space<vmem>>, %arg5: memref<32x1xf32, #tpu.memory_space<vmem>>, %arg6: memref<1x8x256xf32, #tpu.memory_space<vmem>>) attributes {dimension_semantics = [#tpu.dimension_semantics<parallel>], iteration_bounds = array<i64: 2>, scalar_prefetch = 0 : i64, scratch_operands = 0 : i64, tpu.core_type = #tpu.core_type<tc>, window_params = [{transform_indices = @transform_0, window_bounds = array<i64: 1, 16, 256>}, {pipeline_mode = #tpu.pipeline_mode<synchronous>, transform_indices = @transform_1, window_bounds = array<i64: 9, 256>}, {pipeline_mode = #tpu.pipeline_mode<synchronous>, transform_indices = @transform_2, window_bounds = array<i64: 8, 36>}, {pipeline_mode = #tpu.pipeline_mode<synchronous>, transform_indices = @transform_3, window_bounds = array<i64: 32, 72>}, {pipeline_mode = #tpu.pipeline_mode<synchronous>, transform_indices = @transform_4, window_bounds = array<i64: 32, 1>}, {transform_indices = @transform_5, window_bounds = array<i64: 1, 8, 256>}]} {
    %c0 = arith.constant 0 : index
    %c0_0 = arith.constant 0 : index
    %0 = vector.load %arg2[%c0, %c0_0] : memref<9x256xf32, #tpu.memory_space<vmem>>, vector<9x256xf32>
    %c0_1 = arith.constant 0 : index
    %c0_2 = arith.constant 0 : index
    %c0_3 = arith.constant 0 : index
    %1 = vector.load %arg1[%c0_1, %c0_2, %c0_3] : memref<1x16x256xf32, #tpu.memory_space<vmem>>, vector<1x16x256xf32>
    %2 = vector.shape_cast %1 : vector<1x16x256xf32> to vector<16x256xf32>
    %3 = vector.extract_strided_slice %2 {offsets = [0, 0], sizes = [4, 256], strides = [1, 1]} : vector<16x256xf32> to vector<4x256xf32>
    %4 = vector.extract_strided_slice %2 {offsets = [4, 0], sizes = [4, 256], strides = [1, 1]} : vector<16x256xf32> to vector<4x256xf32>
    %5 = vector.extract_strided_slice %2 {offsets = [8, 0], sizes = [4, 256], strides = [1, 1]} : vector<16x256xf32> to vector<4x256xf32>
    %6 = vector.extract_strided_slice %2 {offsets = [12, 0], sizes = [4, 256], strides = [1, 1]} : vector<16x256xf32> to vector<4x256xf32>
    %cst = arith.constant 0.000000e+00 : f32
    %7 = vector.broadcast %cst : f32 to vector<4x17xf32>
    %8 = vector.extract_strided_slice %6 {offsets = [0, 0], sizes = [4, 239], strides = [1, 1]} : vector<4x256xf32> to vector<4x239xf32>
    %9 = tpu.concatenate %7, %8 in 1 : vector<4x17xf32>, vector<4x239xf32> -> vector<4x256xf32>
    %10 = vector.extract_strided_slice %0 {offsets = [0, 0], sizes = [1, 256], strides = [1, 1]} : vector<9x256xf32> to vector<1x256xf32>
    %11 = vector.broadcast %10 : vector<1x256xf32> to vector<4x256xf32>
    %12 = arith.mulf %9, %11 : vector<4x256xf32>
    %cst_4 = arith.constant 0.000000e+00 : f32
    %13 = vector.broadcast %cst_4 : f32 to vector<4x16xf32>
    %14 = vector.extract_strided_slice %5 {offsets = [0, 0], sizes = [4, 240], strides = [1, 1]} : vector<4x256xf32> to vector<4x240xf32>
    %15 = tpu.concatenate %13, %14 in 1 : vector<4x16xf32>, vector<4x240xf32> -> vector<4x256xf32>
    %cst_5 = arith.constant 0.000000e+00 : f32
    %16 = vector.broadcast %cst_5 : f32 to vector<4x16xf32>
    %17 = vector.extract_strided_slice %6 {offsets = [0, 0], sizes = [4, 240], strides = [1, 1]} : vector<4x256xf32> to vector<4x240xf32>
    %18 = tpu.concatenate %16, %17 in 1 : vector<4x16xf32>, vector<4x240xf32> -> vector<4x256xf32>
    %cst_6 = arith.constant 0.000000e+00 : f32
    %19 = vector.broadcast %cst_6 : f32 to vector<4x1xf32>
    %20 = vector.extract_strided_slice %4 {offsets = [0, 0], sizes = [4, 255], strides = [1, 1]} : vector<4x256xf32> to vector<4x255xf32>
    %21 = tpu.concatenate %19, %20 in 1 : vector<4x1xf32>, vector<4x255xf32> -> vector<4x256xf32>
    %22 = vector.extract_strided_slice %0 {offsets = [3, 0], sizes = [1, 256], strides = [1, 1]} : vector<9x256xf32> to vector<1x256xf32>
    %23 = vector.broadcast %22 : vector<1x256xf32> to vector<4x256xf32>
    %24 = arith.mulf %21, %23 : vector<4x256xf32>
    %cst_7 = arith.constant 0.000000e+00 : f32
    %25 = vector.broadcast %cst_7 : f32 to vector<4x1xf32>
    %26 = vector.extract_strided_slice %6 {offsets = [0, 0], sizes = [4, 255], strides = [1, 1]} : vector<4x256xf32> to vector<4x255xf32>
    %27 = tpu.concatenate %25, %26 in 1 : vector<4x1xf32>, vector<4x255xf32> -> vector<4x256xf32>
    %28 = vector.extract_strided_slice %0 {offsets = [3, 0], sizes = [1, 256], strides = [1, 1]} : vector<9x256xf32> to vector<1x256xf32>
    %29 = vector.broadcast %28 : vector<1x256xf32> to vector<4x256xf32>
    %30 = arith.mulf %27, %29 : vector<4x256xf32>
    %31 = tpu.concatenate %12, %15, %18, %24, %3, %4, %30, %5, %6 in 0 : vector<4x256xf32>, vector<4x256xf32>, vector<4x256xf32>, vector<4x256xf32>, vector<4x256xf32>, vector<4x256xf32>, vector<4x256xf32>, vector<4x256xf32>, vector<4x256xf32> -> vector<36x256xf32>
    %c0_8 = arith.constant 0 : index
    %c0_9 = arith.constant 0 : index
    %32 = vector.load %arg3[%c0_8, %c0_9] : memref<8x36xf32, #tpu.memory_space<vmem>>, vector<8x36xf32>
    %cst_10 = arith.constant dense<0.000000e+00> : vector<8x256xf32>
    %33 = tpu.matmul %32, %31, %cst_10 {dimension_numbers = #tpu.dot_dimension_numbers<[1], [0], [0], [1], [0, 0, 1, 1], [], []>} : vector<8x36xf32>, vector<36x256xf32>, vector<8x256xf32> -> vector<8x256xf32>
    %cst_11 = arith.constant 0.000000e+00 : f32
    %34 = vector.broadcast %cst_11 : f32 to vector<8x256xf32>
    %35 = arith.maximumf %33, %34 : vector<8x256xf32>
    %c0_12 = arith.constant 0 : index
    %c0_13 = arith.constant 0 : index
    %36 = vector.load %arg4[%c0_12, %c0_13] : memref<32x72xf32, #tpu.memory_space<vmem>>, vector<32x72xf32>
    %c0_14 = arith.constant 0 : index
    %c0_15 = arith.constant 0 : index
    %37 = vector.load %arg5[%c0_14, %c0_15] : memref<32x1xf32, #tpu.memory_space<vmem>>, vector<32x1xf32>
    %38 = vector.extract_strided_slice %36 {offsets = [0, 0], sizes = [8, 72], strides = [1, 1]} : vector<32x72xf32> to vector<8x72xf32>
    %39 = vector.extract_strided_slice %37 {offsets = [0, 0], sizes = [8, 1], strides = [1, 1]} : vector<32x1xf32> to vector<8x1xf32>
    %40 = vector.extract_strided_slice %36 {offsets = [8, 0], sizes = [8, 72], strides = [1, 1]} : vector<32x72xf32> to vector<8x72xf32>
    %41 = vector.extract_strided_slice %37 {offsets = [8, 0], sizes = [8, 1], strides = [1, 1]} : vector<32x1xf32> to vector<8x1xf32>
    %cst_16 = arith.constant 0.000000e+00 : f32
    %42 = vector.broadcast %cst_16 : f32 to vector<8x17xf32>
    %43 = vector.extract_strided_slice %35 {offsets = [0, 0], sizes = [8, 239], strides = [1, 1]} : vector<8x256xf32> to vector<8x239xf32>
    %44 = tpu.concatenate %42, %43 in 1 : vector<8x17xf32>, vector<8x239xf32> -> vector<8x256xf32>
    %45 = vector.extract_strided_slice %0 {offsets = [0, 0], sizes = [1, 256], strides = [1, 1]} : vector<9x256xf32> to vector<1x256xf32>
    %46 = vector.broadcast %45 : vector<1x256xf32> to vector<8x256xf32>
    %47 = arith.mulf %44, %46 : vector<8x256xf32>
    %cst_17 = arith.constant 0.000000e+00 : f32
    %48 = vector.broadcast %cst_17 : f32 to vector<8x16xf32>
    %49 = vector.extract_strided_slice %35 {offsets = [0, 0], sizes = [8, 240], strides = [1, 1]} : vector<8x256xf32> to vector<8x240xf32>
    %50 = tpu.concatenate %48, %49 in 1 : vector<8x16xf32>, vector<8x240xf32> -> vector<8x256xf32>
    %cst_18 = arith.constant 0.000000e+00 : f32
    %51 = vector.broadcast %cst_18 : f32 to vector<8x15xf32>
    %52 = vector.extract_strided_slice %35 {offsets = [0, 0], sizes = [8, 241], strides = [1, 1]} : vector<8x256xf32> to vector<8x241xf32>
    %53 = tpu.concatenate %51, %52 in 1 : vector<8x15xf32>, vector<8x241xf32> -> vector<8x256xf32>
    %54 = vector.extract_strided_slice %0 {offsets = [2, 0], sizes = [1, 256], strides = [1, 1]} : vector<9x256xf32> to vector<1x256xf32>
    %55 = vector.broadcast %54 : vector<1x256xf32> to vector<8x256xf32>
    %56 = arith.mulf %53, %55 : vector<8x256xf32>
    %cst_19 = arith.constant 0.000000e+00 : f32
    %57 = vector.broadcast %cst_19 : f32 to vector<8x1xf32>
    %58 = vector.extract_strided_slice %35 {offsets = [0, 0], sizes = [8, 255], strides = [1, 1]} : vector<8x256xf32> to vector<8x255xf32>
    %59 = tpu.concatenate %57, %58 in 1 : vector<8x1xf32>, vector<8x255xf32> -> vector<8x256xf32>
    %60 = vector.extract_strided_slice %0 {offsets = [3, 0], sizes = [1, 256], strides = [1, 1]} : vector<9x256xf32> to vector<1x256xf32>
    %61 = vector.broadcast %60 : vector<1x256xf32> to vector<8x256xf32>
    %62 = arith.mulf %59, %61 : vector<8x256xf32>
    %cst_20 = arith.constant 0.000000e+00 : f32
    %63 = vector.broadcast %cst_20 : f32 to vector<8x1xf32>
    %64 = vector.extract_strided_slice %35 {offsets = [0, 1], sizes = [8, 255], strides = [1, 1]} : vector<8x256xf32> to vector<8x255xf32>
    %65 = tpu.concatenate %64, %63 in 1 : vector<8x255xf32>, vector<8x1xf32> -> vector<8x256xf32>
    %66 = vector.extract_strided_slice %0 {offsets = [5, 0], sizes = [1, 256], strides = [1, 1]} : vector<9x256xf32> to vector<1x256xf32>
    %67 = vector.broadcast %66 : vector<1x256xf32> to vector<8x256xf32>
    %68 = arith.mulf %65, %67 : vector<8x256xf32>
    %cst_21 = arith.constant 0.000000e+00 : f32
    %69 = vector.broadcast %cst_21 : f32 to vector<8x15xf32>
    %70 = vector.extract_strided_slice %35 {offsets = [0, 15], sizes = [8, 241], strides = [1, 1]} : vector<8x256xf32> to vector<8x241xf32>
    %71 = tpu.concatenate %70, %69 in 1 : vector<8x241xf32>, vector<8x15xf32> -> vector<8x256xf32>
    %72 = vector.extract_strided_slice %0 {offsets = [6, 0], sizes = [1, 256], strides = [1, 1]} : vector<9x256xf32> to vector<1x256xf32>
    %73 = vector.broadcast %72 : vector<1x256xf32> to vector<8x256xf32>
    %74 = arith.mulf %71, %73 : vector<8x256xf32>
    %cst_22 = arith.constant 0.000000e+00 : f32
    %75 = vector.broadcast %cst_22 : f32 to vector<8x16xf32>
    %76 = vector.extract_strided_slice %35 {offsets = [0, 16], sizes = [8, 240], strides = [1, 1]} : vector<8x256xf32> to vector<8x240xf32>
    %77 = tpu.concatenate %76, %75 in 1 : vector<8x240xf32>, vector<8x16xf32> -> vector<8x256xf32>
    %cst_23 = arith.constant 0.000000e+00 : f32
    %78 = vector.broadcast %cst_23 : f32 to vector<8x17xf32>
    %79 = vector.extract_strided_slice %35 {offsets = [0, 17], sizes = [8, 239], strides = [1, 1]} : vector<8x256xf32> to vector<8x239xf32>
    %80 = tpu.concatenate %79, %78 in 1 : vector<8x239xf32>, vector<8x17xf32> -> vector<8x256xf32>
    %81 = vector.extract_strided_slice %0 {offsets = [8, 0], sizes = [1, 256], strides = [1, 1]} : vector<9x256xf32> to vector<1x256xf32>
    %82 = vector.broadcast %81 : vector<1x256xf32> to vector<8x256xf32>
    %83 = arith.mulf %80, %82 : vector<8x256xf32>
    %84 = tpu.concatenate %47, %50, %56, %62, %35, %68, %74, %77, %83 in 0 : vector<8x256xf32>, vector<8x256xf32>, vector<8x256xf32>, vector<8x256xf32>, vector<8x256xf32>, vector<8x256xf32>, vector<8x256xf32>, vector<8x256xf32>, vector<8x256xf32> -> vector<72x256xf32>
    %cst_24 = arith.constant dense<0.000000e+00> : vector<8x256xf32>
    %85 = tpu.matmul %38, %84, %cst_24 {dimension_numbers = #tpu.dot_dimension_numbers<[1], [0], [0], [1], [0, 0, 1, 1], [], []>} : vector<8x72xf32>, vector<72x256xf32>, vector<8x256xf32> -> vector<8x256xf32>
    %86 = vector.broadcast %39 : vector<8x1xf32> to vector<8x256xf32>
    %87 = arith.addf %85, %86 : vector<8x256xf32>
    %cst_25 = arith.constant 0.000000e+00 : f32
    %88 = vector.broadcast %cst_25 : f32 to vector<8x256xf32>
    %89 = arith.maximumf %87, %88 : vector<8x256xf32>
    %cst_26 = arith.constant 0.000000e+00 : f32
    %90 = vector.broadcast %cst_26 : f32 to vector<8x17xf32>
    %91 = vector.extract_strided_slice %89 {offsets = [0, 0], sizes = [8, 239], strides = [1, 1]} : vector<8x256xf32> to vector<8x239xf32>
    %92 = tpu.concatenate %90, %91 in 1 : vector<8x17xf32>, vector<8x239xf32> -> vector<8x256xf32>
    %93 = vector.extract_strided_slice %0 {offsets = [0, 0], sizes = [1, 256], strides = [1, 1]} : vector<9x256xf32> to vector<1x256xf32>
    %94 = vector.broadcast %93 : vector<1x256xf32> to vector<8x256xf32>
    %95 = arith.mulf %92, %94 : vector<8x256xf32>
    %cst_27 = arith.constant 0.000000e+00 : f32
    %96 = vector.broadcast %cst_27 : f32 to vector<8x16xf32>
    %97 = vector.extract_strided_slice %89 {offsets = [0, 0], sizes = [8, 240], strides = [1, 1]} : vector<8x256xf32> to vector<8x240xf32>
    %98 = tpu.concatenate %96, %97 in 1 : vector<8x16xf32>, vector<8x240xf32> -> vector<8x256xf32>
    %cst_28 = arith.constant 0.000000e+00 : f32
    %99 = vector.broadcast %cst_28 : f32 to vector<8x15xf32>
    %100 = vector.extract_strided_slice %89 {offsets = [0, 0], sizes = [8, 241], strides = [1, 1]} : vector<8x256xf32> to vector<8x241xf32>
    %101 = tpu.concatenate %99, %100 in 1 : vector<8x15xf32>, vector<8x241xf32> -> vector<8x256xf32>
    %102 = vector.extract_strided_slice %0 {offsets = [2, 0], sizes = [1, 256], strides = [1, 1]} : vector<9x256xf32> to vector<1x256xf32>
    %103 = vector.broadcast %102 : vector<1x256xf32> to vector<8x256xf32>
    %104 = arith.mulf %101, %103 : vector<8x256xf32>
    %cst_29 = arith.constant 0.000000e+00 : f32
    %105 = vector.broadcast %cst_29 : f32 to vector<8x1xf32>
    %106 = vector.extract_strided_slice %89 {offsets = [0, 0], sizes = [8, 255], strides = [1, 1]} : vector<8x256xf32> to vector<8x255xf32>
    %107 = tpu.concatenate %105, %106 in 1 : vector<8x1xf32>, vector<8x255xf32> -> vector<8x256xf32>
    %108 = vector.extract_strided_slice %0 {offsets = [3, 0], sizes = [1, 256], strides = [1, 1]} : vector<9x256xf32> to vector<1x256xf32>
    %109 = vector.broadcast %108 : vector<1x256xf32> to vector<8x256xf32>
    %110 = arith.mulf %107, %109 : vector<8x256xf32>
    %cst_30 = arith.constant 0.000000e+00 : f32
    %111 = vector.broadcast %cst_30 : f32 to vector<8x1xf32>
    %112 = vector.extract_strided_slice %89 {offsets = [0, 1], sizes = [8, 255], strides = [1, 1]} : vector<8x256xf32> to vector<8x255xf32>
    %113 = tpu.concatenate %112, %111 in 1 : vector<8x255xf32>, vector<8x1xf32> -> vector<8x256xf32>
    %114 = vector.extract_strided_slice %0 {offsets = [5, 0], sizes = [1, 256], strides = [1, 1]} : vector<9x256xf32> to vector<1x256xf32>
    %115 = vector.broadcast %114 : vector<1x256xf32> to vector<8x256xf32>
    %116 = arith.mulf %113, %115 : vector<8x256xf32>
    %cst_31 = arith.constant 0.000000e+00 : f32
    %117 = vector.broadcast %cst_31 : f32 to vector<8x15xf32>
    %118 = vector.extract_strided_slice %89 {offsets = [0, 15], sizes = [8, 241], strides = [1, 1]} : vector<8x256xf32> to vector<8x241xf32>
    %119 = tpu.concatenate %118, %117 in 1 : vector<8x241xf32>, vector<8x15xf32> -> vector<8x256xf32>
    %120 = vector.extract_strided_slice %0 {offsets = [6, 0], sizes = [1, 256], strides = [1, 1]} : vector<9x256xf32> to vector<1x256xf32>
    %121 = vector.broadcast %120 : vector<1x256xf32> to vector<8x256xf32>
    %122 = arith.mulf %119, %121 : vector<8x256xf32>
    %cst_32 = arith.constant 0.000000e+00 : f32
    %123 = vector.broadcast %cst_32 : f32 to vector<8x16xf32>
    %124 = vector.extract_strided_slice %89 {offsets = [0, 16], sizes = [8, 240], strides = [1, 1]} : vector<8x256xf32> to vector<8x240xf32>
    %125 = tpu.concatenate %124, %123 in 1 : vector<8x240xf32>, vector<8x16xf32> -> vector<8x256xf32>
    %cst_33 = arith.constant 0.000000e+00 : f32
    %126 = vector.broadcast %cst_33 : f32 to vector<8x17xf32>
    %127 = vector.extract_strided_slice %89 {offsets = [0, 17], sizes = [8, 239], strides = [1, 1]} : vector<8x256xf32> to vector<8x239xf32>
    %128 = tpu.concatenate %127, %126 in 1 : vector<8x239xf32>, vector<8x17xf32> -> vector<8x256xf32>
    %129 = vector.extract_strided_slice %0 {offsets = [8, 0], sizes = [1, 256], strides = [1, 1]} : vector<9x256xf32> to vector<1x256xf32>
    %130 = vector.broadcast %129 : vector<1x256xf32> to vector<8x256xf32>
    %131 = arith.mulf %128, %130 : vector<8x256xf32>
    %132 = tpu.concatenate %95, %98, %104, %110, %89, %116, %122, %125, %131 in 0 : vector<8x256xf32>, vector<8x256xf32>, vector<8x256xf32>, vector<8x256xf32>, vector<8x256xf32>, vector<8x256xf32>, vector<8x256xf32>, vector<8x256xf32>, vector<8x256xf32> -> vector<72x256xf32>
    %cst_34 = arith.constant dense<0.000000e+00> : vector<8x256xf32>
    %133 = tpu.matmul %40, %132, %cst_34 {dimension_numbers = #tpu.dot_dimension_numbers<[1], [0], [0], [1], [0, 0, 1, 1], [], []>} : vector<8x72xf32>, vector<72x256xf32>, vector<8x256xf32> -> vector<8x256xf32>
    %134 = vector.broadcast %41 : vector<8x1xf32> to vector<8x256xf32>
    %135 = arith.addf %133, %134 : vector<8x256xf32>
    %136 = arith.addf %135, %35 : vector<8x256xf32>
    %cst_35 = arith.constant 0.000000e+00 : f32
    %137 = vector.broadcast %cst_35 : f32 to vector<8x256xf32>
    %138 = arith.maximumf %136, %137 : vector<8x256xf32>
    %139 = vector.extract_strided_slice %36 {offsets = [16, 0], sizes = [8, 72], strides = [1, 1]} : vector<32x72xf32> to vector<8x72xf32>
    %140 = vector.extract_strided_slice %37 {offsets = [16, 0], sizes = [8, 1], strides = [1, 1]} : vector<32x1xf32> to vector<8x1xf32>
    %141 = vector.extract_strided_slice %36 {offsets = [24, 0], sizes = [8, 72], strides = [1, 1]} : vector<32x72xf32> to vector<8x72xf32>
    %142 = vector.extract_strided_slice %37 {offsets = [24, 0], sizes = [8, 1], strides = [1, 1]} : vector<32x1xf32> to vector<8x1xf32>
    %cst_36 = arith.constant 0.000000e+00 : f32
    %143 = vector.broadcast %cst_36 : f32 to vector<8x17xf32>
    %144 = vector.extract_strided_slice %138 {offsets = [0, 0], sizes = [8, 239], strides = [1, 1]} : vector<8x256xf32> to vector<8x239xf32>
    %145 = tpu.concatenate %143, %144 in 1 : vector<8x17xf32>, vector<8x239xf32> -> vector<8x256xf32>
    %146 = vector.extract_strided_slice %0 {offsets = [0, 0], sizes = [1, 256], strides = [1, 1]} : vector<9x256xf32> to vector<1x256xf32>
    %147 = vector.broadcast %146 : vector<1x256xf32> to vector<8x256xf32>
    %148 = arith.mulf %145, %147 : vector<8x256xf32>
    %cst_37 = arith.constant 0.000000e+00 : f32
    %149 = vector.broadcast %cst_37 : f32 to vector<8x16xf32>
    %150 = vector.extract_strided_slice %138 {offsets = [0, 0], sizes = [8, 240], strides = [1, 1]} : vector<8x256xf32> to vector<8x240xf32>
    %151 = tpu.concatenate %149, %150 in 1 : vector<8x16xf32>, vector<8x240xf32> -> vector<8x256xf32>
    %cst_38 = arith.constant 0.000000e+00 : f32
    %152 = vector.broadcast %cst_38 : f32 to vector<8x15xf32>
    %153 = vector.extract_strided_slice %138 {offsets = [0, 0], sizes = [8, 241], strides = [1, 1]} : vector<8x256xf32> to vector<8x241xf32>
    %154 = tpu.concatenate %152, %153 in 1 : vector<8x15xf32>, vector<8x241xf32> -> vector<8x256xf32>
    %155 = vector.extract_strided_slice %0 {offsets = [2, 0], sizes = [1, 256], strides = [1, 1]} : vector<9x256xf32> to vector<1x256xf32>
    %156 = vector.broadcast %155 : vector<1x256xf32> to vector<8x256xf32>
    %157 = arith.mulf %154, %156 : vector<8x256xf32>
    %cst_39 = arith.constant 0.000000e+00 : f32
    %158 = vector.broadcast %cst_39 : f32 to vector<8x1xf32>
    %159 = vector.extract_strided_slice %138 {offsets = [0, 0], sizes = [8, 255], strides = [1, 1]} : vector<8x256xf32> to vector<8x255xf32>
    %160 = tpu.concatenate %158, %159 in 1 : vector<8x1xf32>, vector<8x255xf32> -> vector<8x256xf32>
    %161 = vector.extract_strided_slice %0 {offsets = [3, 0], sizes = [1, 256], strides = [1, 1]} : vector<9x256xf32> to vector<1x256xf32>
    %162 = vector.broadcast %161 : vector<1x256xf32> to vector<8x256xf32>
    %163 = arith.mulf %160, %162 : vector<8x256xf32>
    %cst_40 = arith.constant 0.000000e+00 : f32
    %164 = vector.broadcast %cst_40 : f32 to vector<8x1xf32>
    %165 = vector.extract_strided_slice %138 {offsets = [0, 1], sizes = [8, 255], strides = [1, 1]} : vector<8x256xf32> to vector<8x255xf32>
    %166 = tpu.concatenate %165, %164 in 1 : vector<8x255xf32>, vector<8x1xf32> -> vector<8x256xf32>
    %167 = vector.extract_strided_slice %0 {offsets = [5, 0], sizes = [1, 256], strides = [1, 1]} : vector<9x256xf32> to vector<1x256xf32>
    %168 = vector.broadcast %167 : vector<1x256xf32> to vector<8x256xf32>
    %169 = arith.mulf %166, %168 : vector<8x256xf32>
    %cst_41 = arith.constant 0.000000e+00 : f32
    %170 = vector.broadcast %cst_41 : f32 to vector<8x15xf32>
    %171 = vector.extract_strided_slice %138 {offsets = [0, 15], sizes = [8, 241], strides = [1, 1]} : vector<8x256xf32> to vector<8x241xf32>
    %172 = tpu.concatenate %171, %170 in 1 : vector<8x241xf32>, vector<8x15xf32> -> vector<8x256xf32>
    %173 = vector.extract_strided_slice %0 {offsets = [6, 0], sizes = [1, 256], strides = [1, 1]} : vector<9x256xf32> to vector<1x256xf32>
    %174 = vector.broadcast %173 : vector<1x256xf32> to vector<8x256xf32>
    %175 = arith.mulf %172, %174 : vector<8x256xf32>
    %cst_42 = arith.constant 0.000000e+00 : f32
    %176 = vector.broadcast %cst_42 : f32 to vector<8x16xf32>
    %177 = vector.extract_strided_slice %138 {offsets = [0, 16], sizes = [8, 240], strides = [1, 1]} : vector<8x256xf32> to vector<8x240xf32>
    %178 = tpu.concatenate %177, %176 in 1 : vector<8x240xf32>, vector<8x16xf32> -> vector<8x256xf32>
    %cst_43 = arith.constant 0.000000e+00 : f32
    %179 = vector.broadcast %cst_43 : f32 to vector<8x17xf32>
    %180 = vector.extract_strided_slice %138 {offsets = [0, 17], sizes = [8, 239], strides = [1, 1]} : vector<8x256xf32> to vector<8x239xf32>
    %181 = tpu.concatenate %180, %179 in 1 : vector<8x239xf32>, vector<8x17xf32> -> vector<8x256xf32>
    %182 = vector.extract_strided_slice %0 {offsets = [8, 0], sizes = [1, 256], strides = [1, 1]} : vector<9x256xf32> to vector<1x256xf32>
    %183 = vector.broadcast %182 : vector<1x256xf32> to vector<8x256xf32>
    %184 = arith.mulf %181, %183 : vector<8x256xf32>
    %185 = tpu.concatenate %148, %151, %157, %163, %138, %169, %175, %178, %184 in 0 : vector<8x256xf32>, vector<8x256xf32>, vector<8x256xf32>, vector<8x256xf32>, vector<8x256xf32>, vector<8x256xf32>, vector<8x256xf32>, vector<8x256xf32>, vector<8x256xf32> -> vector<72x256xf32>
    %cst_44 = arith.constant dense<0.000000e+00> : vector<8x256xf32>
    %186 = tpu.matmul %139, %185, %cst_44 {dimension_numbers = #tpu.dot_dimension_numbers<[1], [0], [0], [1], [0, 0, 1, 1], [], []>} : vector<8x72xf32>, vector<72x256xf32>, vector<8x256xf32> -> vector<8x256xf32>
    %187 = vector.broadcast %140 : vector<8x1xf32> to vector<8x256xf32>
    %188 = arith.addf %186, %187 : vector<8x256xf32>
    %cst_45 = arith.constant 0.000000e+00 : f32
    %189 = vector.broadcast %cst_45 : f32 to vector<8x256xf32>
    %190 = arith.maximumf %188, %189 : vector<8x256xf32>
    %cst_46 = arith.constant 0.000000e+00 : f32
    %191 = vector.broadcast %cst_46 : f32 to vector<8x17xf32>
    %192 = vector.extract_strided_slice %190 {offsets = [0, 0], sizes = [8, 239], strides = [1, 1]} : vector<8x256xf32> to vector<8x239xf32>
    %193 = tpu.concatenate %191, %192 in 1 : vector<8x17xf32>, vector<8x239xf32> -> vector<8x256xf32>
    %194 = vector.extract_strided_slice %0 {offsets = [0, 0], sizes = [1, 256], strides = [1, 1]} : vector<9x256xf32> to vector<1x256xf32>
    %195 = vector.broadcast %194 : vector<1x256xf32> to vector<8x256xf32>
    %196 = arith.mulf %193, %195 : vector<8x256xf32>
    %cst_47 = arith.constant 0.000000e+00 : f32
    %197 = vector.broadcast %cst_47 : f32 to vector<8x16xf32>
    %198 = vector.extract_strided_slice %190 {offsets = [0, 0], sizes = [8, 240], strides = [1, 1]} : vector<8x256xf32> to vector<8x240xf32>
    %199 = tpu.concatenate %197, %198 in 1 : vector<8x16xf32>, vector<8x240xf32> -> vector<8x256xf32>
    %cst_48 = arith.constant 0.000000e+00 : f32
    %200 = vector.broadcast %cst_48 : f32 to vector<8x15xf32>
    %201 = vector.extract_strided_slice %190 {offsets = [0, 0], sizes = [8, 241], strides = [1, 1]} : vector<8x256xf32> to vector<8x241xf32>
    %202 = tpu.concatenate %200, %201 in 1 : vector<8x15xf32>, vector<8x241xf32> -> vector<8x256xf32>
    %203 = vector.extract_strided_slice %0 {offsets = [2, 0], sizes = [1, 256], strides = [1, 1]} : vector<9x256xf32> to vector<1x256xf32>
    %204 = vector.broadcast %203 : vector<1x256xf32> to vector<8x256xf32>
    %205 = arith.mulf %202, %204 : vector<8x256xf32>
    %cst_49 = arith.constant 0.000000e+00 : f32
    %206 = vector.broadcast %cst_49 : f32 to vector<8x1xf32>
    %207 = vector.extract_strided_slice %190 {offsets = [0, 0], sizes = [8, 255], strides = [1, 1]} : vector<8x256xf32> to vector<8x255xf32>
    %208 = tpu.concatenate %206, %207 in 1 : vector<8x1xf32>, vector<8x255xf32> -> vector<8x256xf32>
    %209 = vector.extract_strided_slice %0 {offsets = [3, 0], sizes = [1, 256], strides = [1, 1]} : vector<9x256xf32> to vector<1x256xf32>
    %210 = vector.broadcast %209 : vector<1x256xf32> to vector<8x256xf32>
    %211 = arith.mulf %208, %210 : vector<8x256xf32>
    %cst_50 = arith.constant 0.000000e+00 : f32
    %212 = vector.broadcast %cst_50 : f32 to vector<8x1xf32>
    %213 = vector.extract_strided_slice %190 {offsets = [0, 1], sizes = [8, 255], strides = [1, 1]} : vector<8x256xf32> to vector<8x255xf32>
    %214 = tpu.concatenate %213, %212 in 1 : vector<8x255xf32>, vector<8x1xf32> -> vector<8x256xf32>
    %215 = vector.extract_strided_slice %0 {offsets = [5, 0], sizes = [1, 256], strides = [1, 1]} : vector<9x256xf32> to vector<1x256xf32>
    %216 = vector.broadcast %215 : vector<1x256xf32> to vector<8x256xf32>
    %217 = arith.mulf %214, %216 : vector<8x256xf32>
    %cst_51 = arith.constant 0.000000e+00 : f32
    %218 = vector.broadcast %cst_51 : f32 to vector<8x15xf32>
    %219 = vector.extract_strided_slice %190 {offsets = [0, 15], sizes = [8, 241], strides = [1, 1]} : vector<8x256xf32> to vector<8x241xf32>
    %220 = tpu.concatenate %219, %218 in 1 : vector<8x241xf32>, vector<8x15xf32> -> vector<8x256xf32>
    %221 = vector.extract_strided_slice %0 {offsets = [6, 0], sizes = [1, 256], strides = [1, 1]} : vector<9x256xf32> to vector<1x256xf32>
    %222 = vector.broadcast %221 : vector<1x256xf32> to vector<8x256xf32>
    %223 = arith.mulf %220, %222 : vector<8x256xf32>
    %cst_52 = arith.constant 0.000000e+00 : f32
    %224 = vector.broadcast %cst_52 : f32 to vector<8x16xf32>
    %225 = vector.extract_strided_slice %190 {offsets = [0, 16], sizes = [8, 240], strides = [1, 1]} : vector<8x256xf32> to vector<8x240xf32>
    %226 = tpu.concatenate %225, %224 in 1 : vector<8x240xf32>, vector<8x16xf32> -> vector<8x256xf32>
    %cst_53 = arith.constant 0.000000e+00 : f32
    %227 = vector.broadcast %cst_53 : f32 to vector<8x17xf32>
    %228 = vector.extract_strided_slice %190 {offsets = [0, 17], sizes = [8, 239], strides = [1, 1]} : vector<8x256xf32> to vector<8x239xf32>
    %229 = tpu.concatenate %228, %227 in 1 : vector<8x239xf32>, vector<8x17xf32> -> vector<8x256xf32>
    %230 = vector.extract_strided_slice %0 {offsets = [8, 0], sizes = [1, 256], strides = [1, 1]} : vector<9x256xf32> to vector<1x256xf32>
    %231 = vector.broadcast %230 : vector<1x256xf32> to vector<8x256xf32>
    %232 = arith.mulf %229, %231 : vector<8x256xf32>
    %233 = tpu.concatenate %196, %199, %205, %211, %190, %217, %223, %226, %232 in 0 : vector<8x256xf32>, vector<8x256xf32>, vector<8x256xf32>, vector<8x256xf32>, vector<8x256xf32>, vector<8x256xf32>, vector<8x256xf32>, vector<8x256xf32>, vector<8x256xf32> -> vector<72x256xf32>
    %cst_54 = arith.constant dense<0.000000e+00> : vector<8x256xf32>
    %234 = tpu.matmul %141, %233, %cst_54 {dimension_numbers = #tpu.dot_dimension_numbers<[1], [0], [0], [1], [0, 0, 1, 1], [], []>} : vector<8x72xf32>, vector<72x256xf32>, vector<8x256xf32> -> vector<8x256xf32>
    %235 = vector.broadcast %142 : vector<8x1xf32> to vector<8x256xf32>
    %236 = arith.addf %234, %235 : vector<8x256xf32>
    %237 = arith.addf %236, %138 : vector<8x256xf32>
    %cst_55 = arith.constant 0.000000e+00 : f32
    %238 = vector.broadcast %cst_55 : f32 to vector<8x256xf32>
    %239 = arith.maximumf %237, %238 : vector<8x256xf32>
    %c0_56 = arith.constant 0 : index
    %c0_57 = arith.constant 0 : index
    %c0_58 = arith.constant 0 : index
    %240 = vector.load %arg6[%c0_56, %c0_57, %c0_58] : memref<1x8x256xf32, #tpu.memory_space<vmem>>, vector<1x8x256xf32>
    %241 = vector.shape_cast %240 : vector<1x8x256xf32> to vector<8x256xf32>
    %242 = vector.shape_cast %239 : vector<8x256xf32> to vector<1x8x256xf32>
    tpu.vector_store %arg6[%c0_56, %c0_57, %c0_58], %242 {strides = array<i32>} : memref<1x8x256xf32, #tpu.memory_space<vmem>>, vector<1x8x256xf32>,
    return
  }
  func.func @transform_0(%arg0: i32) -> (i32, i32, i32) {
    %c0_i32 = arith.constant 0 : i32
    %c0_i32_0 = arith.constant 0 : i32
    %c0_i32_1 = arith.constant 0 : i32
    return %arg0, %c0_i32, %c0_i32_0 : i32, i32, i32
  }
  func.func @transform_1(%arg0: i32) -> (i32, i32) {
    %c0_i32 = arith.constant 0 : i32
    %c0_i32_0 = arith.constant 0 : i32
    %c0_i32_1 = arith.constant 0 : i32
    return %c0_i32, %c0_i32_0 : i32, i32
  }
  func.func @transform_2(%arg0: i32) -> (i32, i32) {
    %c0_i32 = arith.constant 0 : i32
    %c0_i32_0 = arith.constant 0 : i32
    %c0_i32_1 = arith.constant 0 : i32
    return %c0_i32, %c0_i32_0 : i32, i32
  }
  func.func @transform_3(%arg0: i32) -> (i32, i32) {
    %c0_i32 = arith.constant 0 : i32
    %c0_i32_0 = arith.constant 0 : i32
    %c0_i32_1 = arith.constant 0 : i32
    return %c0_i32, %c0_i32_0 : i32, i32
  }
  func.func @transform_4(%arg0: i32) -> (i32, i32) {
    %c0_i32 = arith.constant 0 : i32
    %c0_i32_0 = arith.constant 0 : i32
    %c0_i32_1 = arith.constant 0 : i32
    return %c0_i32, %c0_i32_0 : i32, i32
  }
  func.func @transform_5(%arg0: i32) -> (i32, i32, i32) {
    %c0_i32 = arith.constant 0 : i32
    %c0_i32_0 = arith.constant 0 : i32
    %c0_i32_1 = arith.constant 0 : i32
    return %arg0, %c0_i32, %c0_i32_0 : i32, i32, i32
  }
}

</mosaic_0001>

<llo_original>
// kernel: tpu_custom_call.1
$region0: #{tpu_custom_call.1}
  #allocation0 [shape = 'u32[]', space=smem, size = 0x4, offset = 0x4, fixed_abs, tag = 'smem constant byte address 0x4 - core index']
  #allocation1 [shape = 'u32[144,128]{1,0:T(1,128)}', space=vmem, size = 0x12000, scoped, tag = 'internal scratch']
  %s0 = inlined_call_operand.hbm [shape: f32[2,16,256], index: 0, kind: input, shape index: {}]
  %s1 = inlined_call_operand.vmem [shape: f32[9,256], index: 1, kind: input, shape index: {}]
  %s2 = inlined_call_operand.vmem [shape: f32[8,36], index: 2, kind: input, shape index: {}]
  %s3 = inlined_call_operand.hbm [shape: f32[32,72], index: 3, kind: input, shape index: {}]
  %s4 = inlined_call_operand.vmem [shape: f32[32,1], index: 4, kind: input, shape index: {}]
  %s5 = inlined_call_operand.hbm [shape: f32[2,8,256], index: 5, kind: output, shape index: {}]
  %s6 = sld [smem:[#allocation0]]
  $region61: #{tpu_custom_call.1} parent=0
    _
  %s8 = ssub.s32 1, %s6
  %s9 = scalar_select 0, %s8, %s6
  $region1: #{tpu_custom_call.1} parent=0
    #allocation2 [shape = 'u8[32768]{0}', space=vmem, size = 0x8000, scoped, tag = 'input window, operand 0']
    #allocation3 [shape = 's32[2]{0}', space=sflag, size = 0x8, scoped, tag = 'scoped memory for tpu_custom_call.1']
    #allocation4 [shape = 's32[2]{0}', space=sflag, size = 0x8, scoped, tag = 'scoped memory for tpu_custom_call.1']
    #allocation5 [shape = 'u8[16384]{0}', space=vmem, size = 0x4000, scoped, tag = 'input window, operand 3, single buffered']
    #allocation6 [shape = 's32[1]{0}', space=sflag, size = 0x4, scoped, tag = 'scoped memory for tpu_custom_call.1']
    #allocation7 [shape = 'u8[16384]{0}', space=vmem, size = 0x4000, scoped, tag = 'output window, operand 0']
    %10 = vsyncpa [#allocation3], 0
    %s11 = scalar_lea.sflag [#allocation3], 1
    %12 = vsyncpa %s11, 0
    %13 = vsyncpa [#allocation6], 0
    %14 = vsyncpa [#allocation4], 0
    %s15 = scalar_lea.sflag [#allocation4], 1
    %16 = vsyncpa %s15, 0
    loop: start=0, step=1, limit=4
    $region2: #{tpu_custom_call.1} parent=1 // loop_pre_header
      _
    $region3: #{tpu_custom_call.1} parent=1 // loop_header
      %s18 = sphi 0, %s22
      %p19 = scmp.ge.s32.totalorder %s18, 4
      %s28 = sphi 0, %s30
      %s31 = sphi 0, %s28
      %s32 = sphi 0, %s31
      %s48 = sphi 0, %s32
      %s52 = sphi 0, %s52
      %s54 = sphi 0, %s52
      %s55 = sphi 0, %s54
      %s69 = sphi 0, %s55
      %s73 = sphi 0, %s73
      %s75 = sphi 0, %s73
      %s76 = sphi 0, %s75
      %s90 = sphi 0, %s76
      %s94 = sphi 0, %s94
      %s96 = sphi 0, %s94
      %s97 = sphi 0, %s96
      %s111 = sphi 0, %s97
      %s115 = sphi 0, %s115
      %s117 = sphi 0, %s115
      %s118 = sphi 0, %s117
      %s132 = sphi 0, %s118
      %s138 = sphi 0, %s140
      %s141 = sphi 0, %s138
      %s142 = sphi 0, %s141
      %s158 = sphi 0, %s142
    $region4: #{tpu_custom_call.1} parent=1 // loop_header_branch
      %21 = sbr.rel (%p19) target = $region8
    $region5: #{tpu_custom_call.1} parent=1 // loop_body
      %s23 = ssub.s32 %s18, 1
      %s24 = ssub.s32 %s18, 2
      %s25 = sadd.s32 %s18, 1
      %s26 = ssub.s32 %s18, %s25
      %p27 = scmp.eq.s32.totalorder %s26, 0
      %s29 = sadd.s32 %s28, 1
      %s30 = scalar_select %p27, %s28, %s29
      %p33 = pneg %p27
      %p34 = scmp.eq.s32.totalorder %s18, 1
      %p35 = por %p33, %p34
      %p36 = scmp.ne.s32.totalorder %s28, %s31
      %p37 = scmp.eq.s32.totalorder %s18, 0
      %p38 = por %p36, %p37
      %p39 = scmp.ne.s32.totalorder %s28, %s31
      %p40 = scmp.eq.s32.totalorder %s23, 1
      %p41 = por %p39, %p40
      %p42 = scmp.ne.s32.totalorder %s31, %s32
      %p43 = scmp.eq.s32.totalorder %s23, 0
      %p44 = por %p42, %p43
      %p45 = scmp.ne.s32.totalorder %s31, %s32
      %p46 = scmp.eq.s32.totalorder %s24, 1
      %p47 = por %p45, %p46
      %p49 = scmp.ne.s32.totalorder %s32, %s48
      %p50 = scmp.eq.s32.totalorder %s24, 0
      %p51 = por %p49, %p50
      %s53 = sadd.s32 %s52, 1
      %p56 = scmp.eq.s32.totalorder %s18, 1
      %p57 = scmp.ne.s32.totalorder %s52, %s54
      %p58 = scmp.eq.s32.totalorder %s18, 0
      %p59 = por %p57, %p58
      %p60 = scmp.ne.s32.totalorder %s52, %s54
      %p61 = scmp.eq.s32.totalorder %s23, 1
      %p62 = por %p60, %p61
      %p63 = scmp.ne.s32.totalorder %s54, %s55
      %p64 = scmp.eq.s32.totalorder %s23, 0
      %p65 = por %p63, %p64
      %p66 = scmp.ne.s32.totalorder %s54, %s55
      %p67 = scmp.eq.s32.totalorder %s24, 1
      %p68 = por %p66, %p67
      %p70 = scmp.ne.s32.totalorder %s55, %s69
      %p71 = scmp.eq.s32.totalorder %s24, 0
      %p72 = por %p70, %p71
      %s74 = sadd.s32 %s73, 1
      %p77 = scmp.eq.s32.totalorder %s18, 1
      %p78 = scmp.ne.s32.totalorder %s73, %s75
      %p79 = scmp.eq.s32.totalorder %s18, 0
      %p80 = por %p78, %p79
      %p81 = scmp.ne.s32.totalorder %s73, %s75
      %p82 = scmp.eq.s32.totalorder %s23, 1
      %p83 = por %p81, %p82
      %p84 = scmp.ne.s32.totalorder %s75, %s76
      %p85 = scmp.eq.s32.totalorder %s23, 0
      %p86 = por %p84, %p85
      %p87 = scmp.ne.s32.totalorder %s75, %s76
      %p88 = scmp.eq.s32.totalorder %s24, 1
      %p89 = por %p87, %p88
      %p91 = scmp.ne.s32.totalorder %s76, %s90
      %p92 = scmp.eq.s32.totalorder %s24, 0
      %p93 = por %p91, %p92
      %s95 = sadd.s32 %s94, 1
      %p98 = scmp.eq.s32.totalorder %s18, 1
      %p99 = scmp.ne.s32.totalorder %s94, %s96
      %p100 = scmp.eq.s32.totalorder %s18, 0
      %p101 = por %p99, %p100
      %p102 = scmp.ne.s32.totalorder %s94, %s96
      %p103 = scmp.eq.s32.totalorder %s23, 1
      %p104 = por %p102, %p103
      %p105 = scmp.ne.s32.totalorder %s96, %s97
      %p106 = scmp.eq.s32.totalorder %s23, 0
      %p107 = por %p105, %p106
      %p108 = scmp.ne.s32.totalorder %s96, %s97
      %p109 = scmp.eq.s32.totalorder %s24, 1
      %p110 = por %p108, %p109
      %p112 = scmp.ne.s32.totalorder %s97, %s111
      %p113 = scmp.eq.s32.totalorder %s24, 0
      %p114 = por %p112, %p113
      %s116 = sadd.s32 %s115, 1
      %p119 = scmp.eq.s32.totalorder %s18, 1
      %p120 = scmp.ne.s32.totalorder %s115, %s117
      %p121 = scmp.eq.s32.totalorder %s18, 0
      %p122 = por %p120, %p121
      %p123 = scmp.ne.s32.totalorder %s115, %s117
      %p124 = scmp.eq.s32.totalorder %s23, 1
      %p125 = por %p123, %p124
      %p126 = scmp.ne.s32.totalorder %s117, %s118
      %p127 = scmp.eq.s32.totalorder %s23, 0
      %p128 = por %p126, %p127
      %p129 = scmp.ne.s32.totalorder %s117, %s118
      %p130 = scmp.eq.s32.totalorder %s24, 1
      %p131 = por %p129, %p130
      %p133 = scmp.ne.s32.totalorder %s118, %s132
      %p134 = scmp.eq.s32.totalorder %s24, 0
      %p135 = por %p133, %p134
      %s136 = ssub.s32 %s18, %s25
      %p137 = scmp.eq.s32.totalorder %s136, 0
      %s139 = sadd.s32 %s138, 1
      %s140 = scalar_select %p137, %s138, %s139
      %p143 = pneg %p137
      %p144 = scmp.eq.s32.totalorder %s18, 1
      %p145 = por %p143, %p144
      %p146 = scmp.ne.s32.totalorder %s138, %s141
      %p147 = scmp.eq.s32.totalorder %s18, 0
      %p148 = por %p146, %p147
      %p149 = scmp.ne.s32.totalorder %s138, %s141
      %p150 = scmp.eq.s32.totalorder %s23, 1
      %p151 = por %p149, %p150
      %p152 = scmp.ne.s32.totalorder %s141, %s142
      %p153 = scmp.eq.s32.totalorder %s23, 0
      %p154 = por %p152, %p153
      %p155 = scmp.ne.s32.totalorder %s141, %s142
      %p156 = scmp.eq.s32.totalorder %s24, 1
      %p157 = por %p155, %p156
      %p159 = scmp.ne.s32.totalorder %s142, %s158
      %p160 = scmp.eq.s32.totalorder %s24, 0
      %p161 = por %p159, %p160
      %p162 = scmp.le.s32.totalorder 1, %s18
      %p163 = scmp.lt.s32.totalorder %s18, 3
      %p164 = pnand %p162, %p163
      %p165 = pneg %p164
      // Predicated region
      $region9: #{tpu_custom_call.1} parent=5 // pred_check
        _
      $region10: #{tpu_custom_call.1} parent=5 // pred_check_branch
        %167 = sbr.rel (%p164) target = $region12
      $region11: #{tpu_custom_call.1} parent=5 // pred_region
        %s168 = ssub.s32 %s18, 1
        // Predicated region
        $region13: #{tpu_custom_call.1} parent=11 // pred_check
          %p169 = pneg %p65
        $region14: #{tpu_custom_call.1} parent=11 // pred_check_branch
          %171 = sbr.rel (%p169) target = $region16
        $region15: #{tpu_custom_call.1} parent=11 // pred_region
          _
        $region16: #{tpu_custom_call.1} parent=11 // pred_fallthru
          _
        // Predicated region
        $region17: #{tpu_custom_call.1} parent=11 // pred_check
          %p172 = pneg %p86
        $region18: #{tpu_custom_call.1} parent=11 // pred_check_branch
          %174 = sbr.rel (%p172) target = $region20
        $region19: #{tpu_custom_call.1} parent=11 // pred_region
          _
        $region20: #{tpu_custom_call.1} parent=11 // pred_fallthru
          _
        // Predicated region
        $region21: #{tpu_custom_call.1} parent=11 // pred_check
          %p175 = pneg %p107
        $region22: #{tpu_custom_call.1} parent=11 // pred_check_branch
          %177 = sbr.rel (%p175) target = $region24
        $region23: #{tpu_custom_call.1} parent=11 // pred_region
          %s179 = ssub.s32 512, 512
          %180 = vsyncadd [#allocation6], %s179
          %s181 = sshll.u32 [#allocation5], 4
          %s182 = int_to_ptr.vmem [resolvable:$true] %s181
          %187 = dma.hbm_to_vmem [thread:$0]  %s3, 512, %s182, [#allocation6], 128, 128, 8
        $region24: #{tpu_custom_call.1} parent=11 // pred_fallthru
          _
        // Predicated region
        $region25: #{tpu_custom_call.1} parent=11 // pred_check
          %p188 = pneg %p128
        $region26: #{tpu_custom_call.1} parent=11 // pred_check_branch
          %190 = sbr.rel (%p188) target = $region28
        $region27: #{tpu_custom_call.1} parent=11 // pred_region
          _
        $region28: #{tpu_custom_call.1} parent=11 // pred_fallthru
          _
      $region12: #{tpu_custom_call.1} parent=5 // pred_fallthru
        _
      %p191 = scmp.lt.s32.totalorder %s18, 2
      // Predicated region
      $region29: #{tpu_custom_call.1} parent=5 // pred_check
        %p192 = pneg %p191
      $region30: #{tpu_custom_call.1} parent=5 // pred_check_branch
        %194 = sbr.rel (%p192) target = $region32
      $region31: #{tpu_custom_call.1} parent=5 // pred_region
        // Predicated region
        $region33: #{tpu_custom_call.1} parent=31 // pred_check
          %p195 = pneg %p38
        $region34: #{tpu_custom_call.1} parent=31 // pred_check_branch
          %197 = sbr.rel (%p195) target = $region36
        $region35: #{tpu_custom_call.1} parent=31 // pred_region
          %s198 = sand.u32 %s28, 1
          %s199 = scalar_lea.sflag [#allocation3], %s198
          %s200 = sand.u32 %s28, 1
          %s201 = smul.addr %s200, 32
          %s202 = scalar_lea.vmem [#allocation2], %s201
          %s204 = ssub.s32 512, 512
          %205 = vsyncadd %s199, %s204
          %s206 = smul.addr %s18, 4
          %s207 = smul.addr %s206, 128
          %s208 = scalar_lea.hbm %s0, %s207
          %s209 = sshll.u32 %s202, 4
          %s210 = int_to_ptr.vmem [resolvable:$true] %s209
          %215 = dma.hbm_to_vmem [thread:$0]  %s208, 512, %s210, %s199, 256, 256, 16
        $region36: #{tpu_custom_call.1} parent=31 // pred_fallthru
          _
      $region32: #{tpu_custom_call.1} parent=5 // pred_fallthru
        _
      %p216 = scmp.le.s32.totalorder 1, %s18
      %p217 = scmp.lt.s32.totalorder %s18, 3
      %p218 = pnand %p216, %p217
      %p219 = pneg %p218
      // Predicated region
      $region37: #{tpu_custom_call.1} parent=5 // pred_check
        _
      $region38: #{tpu_custom_call.1} parent=5 // pred_check_branch
        %221 = sbr.rel (%p218) target = $region40
      $region39: #{tpu_custom_call.1} parent=5 // pred_region
        %s222 = ssub.s32 %s18, 1
        %s223 = sand.u32 %s31, 1
        %s224 = scalar_lea.sflag [#allocation3], %s223
        %s225 = sand.u32 %s31, 1
        %s226 = smul.addr %s225, 32
        %s227 = scalar_lea.vmem [#allocation2], %s226
        // Predicated region
        $region41: #{tpu_custom_call.1} parent=39 // pred_check
          %p228 = pneg %p44
        $region42: #{tpu_custom_call.1} parent=39 // pred_check_branch
          %230 = sbr.rel (%p228) target = $region44
        $region43: #{tpu_custom_call.1} parent=39 // pred_region
          %231 = dma.done %s224, 512
        $region44: #{tpu_custom_call.1} parent=39 // pred_fallthru
          _
        // Predicated region
        $region45: #{tpu_custom_call.1} parent=39 // pred_check
          %p232 = pneg %p107
        $region46: #{tpu_custom_call.1} parent=39 // pred_check_branch
          %234 = sbr.rel (%p232) target = $region48
        $region47: #{tpu_custom_call.1} parent=39 // pred_region
          %235 = dma.done [#allocation6], 512
        $region48: #{tpu_custom_call.1} parent=39 // pred_fallthru
          _
        %s236 = sand.u32 %s31, 1
        %s237 = scalar_lea.sflag [#allocation3], %s236
        %s238 = sand.u32 %s31, 1
        %s239 = smul.addr %s238, 32
        %s240 = scalar_lea.vmem [#allocation2], %s239
        %p241 = pneg %p44
        %p242 = pneg %p41
        %p243 = pneg %p65
        %p244 = pneg %p62
        %p245 = pneg %p86
        %p246 = pneg %p83
        %p247 = pneg %p107
        %p248 = pneg %p104
        %p249 = pneg %p128
        %p250 = pneg %p125
        %p251 = pneg %p154
        %p252 = pneg %p151
        %s253 = sand.u32 %s141, 1
        %s254 = scalar_lea.sflag [#allocation4], %s253
        %s255 = sand.u32 %s141, 1
        %s256 = smul.addr %s255, 16
        %s257 = scalar_lea.vmem [#allocation7], %s256
        %v258 = vld [vmem:[%s1] sm:$0xff]
        %v259 = vld [vmem:[%s1 + $0x8] sm:$0xff]
        %v260 = vld [vmem:[%s1 + $0x10] sm:$0x1]
        %v261 = vld [vmem:[%s1 + $0x18] sm:$0x1]
        %v262 = vld [vmem:[%s227] sm:$0xff]
        %v263 = vld [vmem:[%s227 + $0x8] sm:$0xff]
        %v264 = vld [vmem:[%s227 + $0x10] sm:$0xff]
        %v265 = vld [vmem:[%s227 + $0x18] sm:$0xff]
        %v268 = vrot.slane %v264, 4
        %v269 = vrot.slane %v265, 4
        %270 = vrot.lane.b32.xlu0 %v268, 17
        %v271 = vpop.permute.xlu0 %270
        %272 = vrot.lane.b32.xlu0 %v269, 17
        %v273 = vpop.permute.xlu0 %272
        %vm274 = vcmask 138240
        %v275 = vsel %vm274, %v271, %v273
        %v278 = vsel %vm274, 0.0, %v271
        %v279 = vlaneseq
        %v280 = vshrl.u32 %v279, 7
        %v281 = vsub.s32 0, %v280
        %v282 = vrot.slane %v258, %v281
        %v283 = vlaneseq
        %v284 = vshrl.u32 %v283, 7
        %v285 = vsub.s32 0, %v284
        %v286 = vrot.slane %v259, %v285
        %v287 = vmul.f32 %v278, %v282
        %v288 = vmul.f32 %v275, %v286
        %289 = vrot.lane.b32.xlu0 %v264, 16
        %v290 = vpop.permute.xlu0 %289
        %291 = vrot.lane.b32.xlu0 %v265, 16
        %v292 = vpop.permute.xlu0 %291
        %vm293 = vcmask 130048
        %v294 = vsel %vm293, %v290, %v292
        %v296 = vsel %vm293, 0.0, %v290
        %297 = vrot.lane.b32.xlu0 %v268, 16
        %v298 = vpop.permute.xlu0 %297
        %299 = vrot.lane.b32.xlu0 %v269, 16
        %v300 = vpop.permute.xlu0 %299
        %v301 = vsel %vm293, %v298, %v300
        %v304 = vsel %vm293, 0.0, %v298
        %v307 = vrot.slane %v262, 4
        %v308 = vrot.slane %v263, 4
        %309 = vrot.lane.b32.xlu0 %v307, 1
        %v310 = vpop.permute.xlu0 %309
        %311 = vrot.lane.b32.xlu0 %v308, 1
        %v312 = vpop.permute.xlu0 %311
        %vm313 = vcmask 7168
        %v314 = vsel %vm313, %v310, %v312
        %v317 = vsel %vm313, 0.0, %v310
        %v318 = vlaneseq
        %v319 = vshrl.u32 %v318, 7
        %v320 = vsub.s32 3, %v319
        %v321 = vrot.slane %v258, %v320
        %v322 = vlaneseq
        %v323 = vshrl.u32 %v322, 7
        %v324 = vsub.s32 3, %v323
        %v325 = vrot.slane %v259, %v324
        %v326 = vmul.f32 %v317, %v321
        %v327 = vmul.f32 %v314, %v325
        %328 = vrot.lane.b32.xlu0 %v268, 1
        %v329 = vpop.permute.xlu0 %328
        %330 = vrot.lane.b32.xlu0 %v269, 1
        %v331 = vpop.permute.xlu0 %330
        %v332 = vsel %vm313, %v329, %v331
        %v335 = vsel %vm313, 0.0, %v329
        %v336 = vmul.f32 %v335, %v321
        %v337 = vmul.f32 %v332, %v325
        %v339 = vrot.slane %v296, 4
        %v340 = vrot.slane %v294, 4
        %v345 = vrot.slane %v326, 4
        %v346 = vrot.slane %v327, 4
        %vm351 = vcmask 1043456
        %v352 = vsel %vm351, %v287, %v339
        %v353 = vsel %vm351, %v288, %v340
        %v354 = vsel %vm351, %v304, %v345
        %v355 = vsel %vm351, %v301, %v346
        %v356 = vsel %vm351, %v336, %v268
        %v357 = vsel %vm351, %v337, %v269
        %v358 = vld [vmem:[%s2] sm:$0xff]
        %vm359 = vcmask 293888
        %v361 = vsel %vm359, %v358, 0
        %v363 = vsel %vm351, %v268, 0
        %v365 = vsel %vm351, %v269, 0
        %367 = vmatprep.subr.mxu0 %v353
        %368 = vmatpush1.msra.mxu0 %v352
        %369 = vmatprep.subr.mxu0 %v355
        %370 = vmatpush1.msra.mxu0 %v354
        %371 = vmatprep.subr.mxu0 %v263
        %372 = vmatpush1.msra.mxu0 %v262
        %373 = vmatprep.subr.mxu0 %v357
        %374 = vmatpush1.msra.mxu0 %v356
        %375 = vmatprep.subr.mxu0 %v365
        %376 = vmatpush1.msra.mxu0 %v363
        %377 = vmatprep.subr.mxu0 0.0
        %378 = vmatpush1.msra.mxu0 0.0
        %379 = vmatprep.subr.mxu0 0.0
        %380 = vmatpush1.msra.mxu0 0.0
        %381 = vmatprep.subr.mxu0 0.0
        %382 = vmatpush1.msra.mxu0 0.0
        %383 = vmatprep.subr.mxu0 0.0
        %384 = vmatpush1.msra.mxu0 0.0
        %385 = vmatprep.subr.mxu0 0.0
        %386 = vmatpush1.msra.mxu0 0.0
        %387 = vmatprep.subr.mxu0 0.0
        %388 = vmatpush1.msra.mxu0 0.0
        %389 = vmatprep.subr.mxu0 0.0
        %390 = vmatpush1.msra.mxu0 0.0
        %391 = vmatprep.subr.mxu0 0.0
        %392 = vmatpush1.msra.mxu0 0.0
        %393 = vmatprep.subr.mxu0 0.0
        %394 = vmatpush1.msra.mxu0 0.0
        %395 = vmatprep.subr.mxu0 0.0
        %396 = vmatpush1.msra.mxu0 0.0
        %397 = vmatprep.subr.mxu0 0.0
        %398 = vmatpush1.msra.mxu0 0.0
        %399 = vmatprep.subr.mxu0 0.0
        %400 = vmatpush1.msra.mxu0 0.0
        %401 = vmatprep.subr.mxu0 0.0
        %402 = vmatpush1.msra.mxu0 0.0
        %403 = vmatprep.subr.mxu0 0.0
        %404 = vmatpush1.msra.mxu0 0.0
        %405 = vmatprep.subr.mxu0 0.0
        %406 = vmatpush1.msra.mxu0 0.0
        %407 = vmatprep.subr.mxu0 0.0
        %408 = vmatpush1.msra.mxu0 0.0
        %409 = vmatprep.subr.mxu0 0.0
        %410 = vmatpush1.msra.mxu0 0.0
        %411 = vmatprep.subr.mxu0 0.0
        %412 = vmatpush1.msra.mxu0 0.0
        %413 = vmatprep.subr.mxu0 0.0
        %414 = vmatpush1.msra.mxu0 0.0
        %415 = vmatprep.subr.mxu0 0.0
        %416 = vmatpush1.msra.mxu0 0.0
        %417 = vmatprep.subr.mxu0 0.0
        %418 = vmatpush1.msra.mxu0 0.0
        %419 = vmatprep.subr.mxu0 0.0
        %420 = vmatpush1.msra.mxu0 0.0
        %421 = vmatprep.subr.mxu0 0.0
        %422 = vmatpush1.msra.mxu0 0.0
        %423 = vmatprep.subr.mxu0 0.0
        %424 = vmatpush1.msra.mxu0 0.0
        %425 = vmatprep.subr.mxu0 0.0
        %426 = vmatpush1.msra.mxu0 0.0
        %427 = vmatprep.subr.mxu0 0.0
        %428 = vmatpush1.msra.mxu0 0.0
        %429 = vmatprep.subr.mxu0 0.0
        %430 = vmatpush1.msra.mxu0 0.0
        %431 = vmatprep.mubr.f32.mxu0 0.0
        %432 = vmatmul.mubr.f32.gmra.mrb[0].mxu0 %v361
        %v433 = vpop.f32.mrb[0].mxu0
        %v434 = vadd.f32 0.0, %v433
        %v435 = vpop.f32.mrb[0].mxu0
        %v436 = vadd.f32 0.0, %v435
        %437 = vdwg.mxu0
        %v438 = vmax.f32 %v434, 0.0
        %v439 = vmax.f32 %v436, 0.0
        %v440 = vld [vmem:[#allocation5] sm:$0xff]
        %v441 = vld [vmem:[#allocation5 + $0x8] sm:$0xff]
        %v442 = vld [vmem:[#allocation5 + $0x10] sm:$0xff]
        %v443 = vld [vmem:[#allocation5 + $0x18] sm:$0xff]
        %v444 = vld [vmem:[%s4] sm:$0xff]
        %v445 = vld [vmem:[%s4 + $0x8] sm:$0xff]
        %v446 = vld [vmem:[%s4 + $0x10] sm:$0xff]
        %v447 = vld [vmem:[%s4 + $0x18] sm:$0xff]
        %450 = vrot.lane.b32.xlu0 %v438, 17
        %v451 = vpop.permute.xlu0 %450
        %452 = vrot.lane.b32.xlu0 %v439, 17
        %v453 = vpop.permute.xlu0 %452
        %v454 = vsel %vm274, %v451, %v453
        %v457 = vsel %vm274, 0.0, %v451
        %v458 = vmul.f32 %v457, %v282
        %v459 = vmul.f32 %v454, %v286
        %460 = vrot.lane.b32.xlu0 %v438, 16
        %v461 = vpop.permute.xlu0 %460
        %462 = vrot.lane.b32.xlu0 %v439, 16
        %v463 = vpop.permute.xlu0 %462
        %v464 = vsel %vm293, %v461, %v463
        %v467 = vsel %vm293, 0.0, %v461
        %468 = vrot.lane.b32.xlu0 %v438, 15
        %v469 = vpop.permute.xlu0 %468
        %470 = vrot.lane.b32.xlu0 %v439, 15
        %v471 = vpop.permute.xlu0 %470
        %vm472 = vcmask 121856
        %v473 = vsel %vm472, %v469, %v471
        %v476 = vsel %vm472, 0.0, %v469
        %v477 = vlaneseq
        %v478 = vshrl.u32 %v477, 7
        %v479 = vsub.s32 2, %v478
        %v480 = vrot.slane %v258, %v479
        %v481 = vlaneseq
        %v482 = vshrl.u32 %v481, 7
        %v483 = vsub.s32 2, %v482
        %v484 = vrot.slane %v259, %v483
        %v485 = vmul.f32 %v476, %v480
        %v486 = vmul.f32 %v473, %v484
        %487 = vrot.lane.b32.xlu0 %v438, 1
        %v488 = vpop.permute.xlu0 %487
        %489 = vrot.lane.b32.xlu0 %v439, 1
        %v490 = vpop.permute.xlu0 %489
        %v491 = vsel %vm313, %v488, %v490
        %v494 = vsel %vm313, 0.0, %v488
        %v495 = vmul.f32 %v494, %v321
        %v496 = vmul.f32 %v491, %v325
        %497 = vrot.lane.b32.xlu0 %v438, 127
        %v498 = vpop.permute.xlu0 %497
        %499 = vrot.lane.b32.xlu0 %v439, 127
        %v500 = vpop.permute.xlu0 %499
        %vm501 = vcmask 1039360
        %v502 = vsel %vm501, %v498, %v500
        %v505 = vsel %vm501, %v500, 0.0
        %v506 = vlaneseq
        %v507 = vshrl.u32 %v506, 7
        %v508 = vsub.s32 5, %v507
        %v509 = vrot.slane %v258, %v508
        %v510 = vlaneseq
        %v511 = vshrl.u32 %v510, 7
        %v512 = vsub.s32 5, %v511
        %v513 = vrot.slane %v259, %v512
        %v514 = vmul.f32 %v502, %v509
        %v515 = vmul.f32 %v505, %v513
        %516 = vrot.lane.b32.xlu0 %v438, 113
        %v517 = vpop.permute.xlu0 %516
        %518 = vrot.lane.b32.xlu0 %v439, 113
        %v519 = vpop.permute.xlu0 %518
        %vm520 = vcmask 924672
        %v521 = vsel %vm520, %v517, %v519
        %v524 = vsel %vm520, %v519, 0.0
        %v525 = vlaneseq
        %v526 = vshrl.u32 %v525, 7
        %v527 = vsub.s32 6, %v526
        %v528 = vrot.slane %v258, %v527
        %v529 = vlaneseq
        %v530 = vshrl.u32 %v529, 7
        %v531 = vsub.s32 6, %v530
        %v532 = vrot.slane %v259, %v531
        %v533 = vmul.f32 %v521, %v528
        %v534 = vmul.f32 %v524, %v532
        %535 = vrot.lane.b32.xlu0 %v438, 112
        %v536 = vpop.permute.xlu0 %535
        %537 = vrot.lane.b32.xlu0 %v439, 112
        %v538 = vpop.permute.xlu0 %537
        %vm539 = vcmask 916480
        %v540 = vsel %vm539, %v536, %v538
        %v543 = vsel %vm539, %v538, 0.0
        %544 = vrot.lane.b32.xlu0 %v438, 111
        %v545 = vpop.permute.xlu0 %544
        %546 = vrot.lane.b32.xlu0 %v439, 111
        %v547 = vpop.permute.xlu0 %546
        %vm548 = vcmask 908288
        %v549 = vsel %vm548, %v545, %v547
        %v552 = vsel %vm548, %v547, 0.0
        %v553 = vlaneseq
        %v554 = vshrl.u32 %v553, 7
        %v555 = vsub.s32 0, %v554
        %v556 = vrot.slane %v260, %v555
        %v557 = vlaneseq
        %v558 = vshrl.u32 %v557, 7
        %v559 = vsub.s32 0, %v558
        %v560 = vrot.slane %v261, %v559
        %v561 = vmul.f32 %v549, %v556
        %v562 = vmul.f32 %v552, %v560
        %564 = vset.pattern.permute.xlu0 0
        %565 = vperm.xlu0 %564, %v444
        %v566 = vpop.permute.xlu0 %565
        %vm568 = vcmask 588800
        %v570 = vsel %vm568, %v440, 0
        %572 = vmatprep.subr.mxu0 %v459
        %573 = vmatpush1.msra.mxu0 %v458
        %574 = vmatprep.subr.mxu0 %v464
        %575 = vmatpush1.msra.mxu0 %v467
        %576 = vmatprep.subr.mxu0 %v486
        %577 = vmatpush1.msra.mxu0 %v485
        %578 = vmatprep.subr.mxu0 %v496
        %579 = vmatpush1.msra.mxu0 %v495
        %580 = vmatprep.subr.mxu0 %v439
        %581 = vmatpush1.msra.mxu0 %v438
        %582 = vmatprep.subr.mxu0 %v515
        %583 = vmatpush1.msra.mxu0 %v514
        %584 = vmatprep.subr.mxu0 %v534
        %585 = vmatpush1.msra.mxu0 %v533
        %586 = vmatprep.subr.mxu0 %v543
        %587 = vmatpush1.msra.mxu0 %v540
        %588 = vmatprep.subr.mxu0 %v562
        %589 = vmatpush1.msra.mxu0 %v561
        %590 = vmatprep.subr.mxu0 0.0
        %591 = vmatpush1.msra.mxu0 0.0
        %592 = vmatprep.subr.mxu0 0.0
        %593 = vmatpush1.msra.mxu0 0.0
        %594 = vmatprep.subr.mxu0 0.0
        %595 = vmatpush1.msra.mxu0 0.0
        %596 = vmatprep.subr.mxu0 0.0
        %597 = vmatpush1.msra.mxu0 0.0
        %598 = vmatprep.subr.mxu0 0.0
        %599 = vmatpush1.msra.mxu0 0.0
        %600 = vmatprep.subr.mxu0 0.0
        %601 = vmatpush1.msra.mxu0 0.0
        %602 = vmatprep.subr.mxu0 0.0
        %603 = vmatpush1.msra.mxu0 0.0
        %604 = vmatprep.subr.mxu0 0.0
        %605 = vmatpush1.msra.mxu0 0.0
        %606 = vmatprep.subr.mxu0 0.0
        %607 = vmatpush1.msra.mxu0 0.0
        %608 = vmatprep.subr.mxu0 0.0
        %609 = vmatpush1.msra.mxu0 0.0
        %610 = vmatprep.subr.mxu0 0.0
        %611 = vmatpush1.msra.mxu0 0.0
        %612 = vmatprep.subr.mxu0 0.0
        %613 = vmatpush1.msra.mxu0 0.0
        %614 = vmatprep.subr.mxu0 0.0
        %615 = vmatpush1.msra.mxu0 0.0
        %616 = vmatprep.subr.mxu0 0.0
        %617 = vmatpush1.msra.mxu0 0.0
        %618 = vmatprep.subr.mxu0 0.0
        %619 = vmatpush1.msra.mxu0 0.0
        %620 = vmatprep.subr.mxu0 0.0
        %621 = vmatpush1.msra.mxu0 0.0
        %622 = vmatprep.subr.mxu0 0.0
        %623 = vmatpush1.msra.mxu0 0.0
        %624 = vmatprep.subr.mxu0 0.0
        %625 = vmatpush1.msra.mxu0 0.0
        %626 = vmatprep.subr.mxu0 0.0
        %627 = vmatpush1.msra.mxu0 0.0
        %628 = vmatprep.subr.mxu0 0.0
        %629 = vmatpush1.msra.mxu0 0.0
        %630 = vmatprep.subr.mxu0 0.0
        %631 = vmatpush1.msra.mxu0 0.0
        %632 = vmatprep.subr.mxu0 0.0
        %633 = vmatpush1.msra.mxu0 0.0
        %634 = vmatprep.subr.mxu0 0.0
        %635 = vmatpush1.msra.mxu0 0.0
        %636 = vmatprep.mubr.f32.mxu0 0.0
        %637 = vmatmul.mubr.f32.gmra.mrb[0].mxu0 %v570
        %v638 = vpop.f32.mrb[0].mxu0
        %v639 = vadd.f32 %v566, %v638
        %v640 = vpop.f32.mrb[0].mxu0
        %v641 = vadd.f32 %v566, %v640
        %642 = vdwg.mxu0
        %v643 = vmax.f32 %v639, 0.0
        %v644 = vmax.f32 %v641, 0.0
        %647 = vrot.lane.b32.xlu0 %v643, 17
        %v648 = vpop.permute.xlu0 %647
        %649 = vrot.lane.b32.xlu0 %v644, 17
        %v650 = vpop.permute.xlu0 %649
        %v651 = vsel %vm274, %v648, %v650
        %v654 = vsel %vm274, 0.0, %v648
        %v655 = vmul.f32 %v654, %v282
        %v656 = vmul.f32 %v651, %v286
        %657 = vrot.lane.b32.xlu0 %v643, 16
        %v658 = vpop.permute.xlu0 %657
        %659 = vrot.lane.b32.xlu0 %v644, 16
        %v660 = vpop.permute.xlu0 %659
        %v661 = vsel %vm293, %v658, %v660
        %v664 = vsel %vm293, 0.0, %v658
        %665 = vrot.lane.b32.xlu0 %v643, 15
        %v666 = vpop.permute.xlu0 %665
        %667 = vrot.lane.b32.xlu0 %v644, 15
        %v668 = vpop.permute.xlu0 %667
        %v669 = vsel %vm472, %v666, %v668
        %v672 = vsel %vm472, 0.0, %v666
        %v673 = vmul.f32 %v672, %v480
        %v674 = vmul.f32 %v669, %v484
        %675 = vrot.lane.b32.xlu0 %v643, 1
        %v676 = vpop.permute.xlu0 %675
        %677 = vrot.lane.b32.xlu0 %v644, 1
        %v678 = vpop.permute.xlu0 %677
        %v679 = vsel %vm313, %v676, %v678
        %v682 = vsel %vm313, 0.0, %v676
        %v683 = vmul.f32 %v682, %v321
        %v684 = vmul.f32 %v679, %v325
        %685 = vrot.lane.b32.xlu0 %v643, 127
        %v686 = vpop.permute.xlu0 %685
        %687 = vrot.lane.b32.xlu0 %v644, 127
        %v688 = vpop.permute.xlu0 %687
        %v689 = vsel %vm501, %v686, %v688
        %v692 = vsel %vm501, %v688, 0.0
        %v693 = vmul.f32 %v689, %v509
        %v694 = vmul.f32 %v692, %v513
        %695 = vrot.lane.b32.xlu0 %v643, 113
        %v696 = vpop.permute.xlu0 %695
        %697 = vrot.lane.b32.xlu0 %v644, 113
        %v698 = vpop.permute.xlu0 %697
        %v699 = vsel %vm520, %v696, %v698
        %v702 = vsel %vm520, %v698, 0.0
        %v703 = vmul.f32 %v699, %v528
        %v704 = vmul.f32 %v702, %v532
        %705 = vrot.lane.b32.xlu0 %v643, 112
        %v706 = vpop.permute.xlu0 %705
        %707 = vrot.lane.b32.xlu0 %v644, 112
        %v708 = vpop.permute.xlu0 %707
        %v709 = vsel %vm539, %v706, %v708
        %v712 = vsel %vm539, %v708, 0.0
        %713 = vrot.lane.b32.xlu0 %v643, 111
        %v714 = vpop.permute.xlu0 %713
        %715 = vrot.lane.b32.xlu0 %v644, 111
        %v716 = vpop.permute.xlu0 %715
        %v717 = vsel %vm548, %v714, %v716
        %v720 = vsel %vm548, %v716, 0.0
        %v721 = vmul.f32 %v717, %v556
        %v722 = vmul.f32 %v720, %v560
        %724 = vset.pattern.permute.xlu0 0
        %725 = vperm.xlu0 %724, %v445
        %v726 = vpop.permute.xlu0 %725
        %v729 = vsel %vm568, %v441, 0
        %731 = vmatprep.subr.mxu0 %v656
        %732 = vmatpush1.msra.mxu0 %v655
        %733 = vmatprep.subr.mxu0 %v661
        %734 = vmatpush1.msra.mxu0 %v664
        %735 = vmatprep.subr.mxu0 %v674
        %736 = vmatpush1.msra.mxu0 %v673
        %737 = vmatprep.subr.mxu0 %v684
        %738 = vmatpush1.msra.mxu0 %v683
        %739 = vmatprep.subr.mxu0 %v644
        %740 = vmatpush1.msra.mxu0 %v643
        %741 = vmatprep.subr.mxu0 %v694
        %742 = vmatpush1.msra.mxu0 %v693
        %743 = vmatprep.subr.mxu0 %v704
        %744 = vmatpush1.msra.mxu0 %v703
        %745 = vmatprep.subr.mxu0 %v712
        %746 = vmatpush1.msra.mxu0 %v709
        %747 = vmatprep.subr.mxu0 %v722
        %748 = vmatpush1.msra.mxu0 %v721
        %749 = vmatprep.subr.mxu0 0.0
        %750 = vmatpush1.msra.mxu0 0.0
        %751 = vmatprep.subr.mxu0 0.0
        %752 = vmatpush1.msra.mxu0 0.0
        %753 = vmatprep.subr.mxu0 0.0
        %754 = vmatpush1.msra.mxu0 0.0
        %755 = vmatprep.subr.mxu0 0.0
        %756 = vmatpush1.msra.mxu0 0.0
        %757 = vmatprep.subr.mxu0 0.0
        %758 = vmatpush1.msra.mxu0 0.0
        %759 = vmatprep.subr.mxu0 0.0
        %760 = vmatpush1.msra.mxu0 0.0
        %761 = vmatprep.subr.mxu0 0.0
        %762 = vmatpush1.msra.mxu0 0.0
        %763 = vmatprep.subr.mxu0 0.0
        %764 = vmatpush1.msra.mxu0 0.0
        %765 = vmatprep.subr.mxu0 0.0
        %766 = vmatpush1.msra.mxu0 0.0
        %767 = vmatprep.subr.mxu0 0.0
        %768 = vmatpush1.msra.mxu0 0.0
        %769 = vmatprep.subr.mxu0 0.0
        %770 = vmatpush1.msra.mxu0 0.0
        %771 = vmatprep.subr.mxu0 0.0
        %772 = vmatpush1.msra.mxu0 0.0
        %773 = vmatprep.subr.mxu0 0.0
        %774 = vmatpush1.msra.mxu0 0.0
        %775 = vmatprep.subr.mxu0 0.0
        %776 = vmatpush1.msra.mxu0 0.0
        %777 = vmatprep.subr.mxu0 0.0
        %778 = vmatpush1.msra.mxu0 0.0
        %779 = vmatprep.subr.mxu0 0.0
        %780 = vmatpush1.msra.mxu0 0.0
        %781 = vmatprep.subr.mxu0 0.0
        %782 = vmatpush1.msra.mxu0 0.0
        %783 = vmatprep.subr.mxu0 0.0
        %784 = vmatpush1.msra.mxu0 0.0
        %785 = vmatprep.subr.mxu0 0.0
        %786 = vmatpush1.msra.mxu0 0.0
        %787 = vmatprep.subr.mxu0 0.0
        %788 = vmatpush1.msra.mxu0 0.0
        %789 = vmatprep.subr.mxu0 0.0
        %790 = vmatpush1.msra.mxu0 0.0
        %791 = vmatprep.subr.mxu0 0.0
        %792 = vmatpush1.msra.mxu0 0.0
        %793 = vmatprep.subr.mxu0 0.0
        %794 = vmatpush1.msra.mxu0 0.0
        %795 = vmatprep.mubr.f32.mxu0 0.0
        %796 = vmatmul.mubr.f32.gmra.mrb[0].mxu0 %v729
        %v797 = vpop.f32.mrb[0].mxu0
        %v798 = vadd.f32 %v726, %v797
        %v799 = vpop.f32.mrb[0].mxu0
        %v800 = vadd.f32 %v726, %v799
        %801 = vdwg.mxu0
        %v802 = vadd.f32 %v798, %v438
        %v803 = vadd.f32 %v800, %v439
        %v804 = vmax.f32 %v802, 0.0
        %v805 = vmax.f32 %v803, 0.0
        %808 = vrot.lane.b32.xlu0 %v804, 17
        %v809 = vpop.permute.xlu0 %808
        %810 = vrot.lane.b32.xlu0 %v805, 17
        %v811 = vpop.permute.xlu0 %810
        %v812 = vsel %vm274, %v809, %v811
        %v815 = vsel %vm274, 0.0, %v809
        %v816 = vmul.f32 %v815, %v282
        %v817 = vmul.f32 %v812, %v286
        %818 = vrot.lane.b32.xlu0 %v804, 16
        %v819 = vpop.permute.xlu0 %818
        %820 = vrot.lane.b32.xlu0 %v805, 16
        %v821 = vpop.permute.xlu0 %820
        %v822 = vsel %vm293, %v819, %v821
        %v825 = vsel %vm293, 0.0, %v819
        %826 = vrot.lane.b32.xlu0 %v804, 15
        %v827 = vpop.permute.xlu0 %826
        %828 = vrot.lane.b32.xlu0 %v805, 15
        %v829 = vpop.permute.xlu0 %828
        %v830 = vsel %vm472, %v827, %v829
        %v833 = vsel %vm472, 0.0, %v827
        %v834 = vmul.f32 %v833, %v480
        %v835 = vmul.f32 %v830, %v484
        %836 = vrot.lane.b32.xlu0 %v804, 1
        %v837 = vpop.permute.xlu0 %836
        %838 = vrot.lane.b32.xlu0 %v805, 1
        %v839 = vpop.permute.xlu0 %838
        %v840 = vsel %vm313, %v837, %v839
        %v843 = vsel %vm313, 0.0, %v837
        %v844 = vmul.f32 %v843, %v321
        %v845 = vmul.f32 %v840, %v325
        %846 = vrot.lane.b32.xlu0 %v804, 127
        %v847 = vpop.permute.xlu0 %846
        %848 = vrot.lane.b32.xlu0 %v805, 127
        %v849 = vpop.permute.xlu0 %848
        %v850 = vsel %vm501, %v847, %v849
        %v853 = vsel %vm501, %v849, 0.0
        %v854 = vmul.f32 %v850, %v509
        %v855 = vmul.f32 %v853, %v513
        %856 = vrot.lane.b32.xlu0 %v804, 113
        %v857 = vpop.permute.xlu0 %856
        %858 = vrot.lane.b32.xlu0 %v805, 113
        %v859 = vpop.permute.xlu0 %858
        %v860 = vsel %vm520, %v857, %v859
        %v863 = vsel %vm520, %v859, 0.0
        %v864 = vmul.f32 %v860, %v528
        %v865 = vmul.f32 %v863, %v532
        %866 = vrot.lane.b32.xlu0 %v804, 112
        %v867 = vpop.permute.xlu0 %866
        %868 = vrot.lane.b32.xlu0 %v805, 112
        %v869 = vpop.permute.xlu0 %868
        %v870 = vsel %vm539, %v867, %v869
        %v873 = vsel %vm539, %v869, 0.0
        %874 = vrot.lane.b32.xlu0 %v804, 111
        %v875 = vpop.permute.xlu0 %874
        %876 = vrot.lane.b32.xlu0 %v805, 111
        %v877 = vpop.permute.xlu0 %876
        %v878 = vsel %vm548, %v875, %v877
        %v881 = vsel %vm548, %v877, 0.0
        %v882 = vmul.f32 %v878, %v556
        %v883 = vmul.f32 %v881, %v560
        %885 = vset.pattern.permute.xlu0 0
        %886 = vperm.xlu0 %885, %v446
        %v887 = vpop.permute.xlu0 %886
        %v890 = vsel %vm568, %v442, 0
        %892 = vmatprep.subr.mxu0 %v817
        %893 = vmatpush1.msra.mxu0 %v816
        %894 = vmatprep.subr.mxu0 %v822
        %895 = vmatpush1.msra.mxu0 %v825
        %896 = vmatprep.subr.mxu0 %v835
        %897 = vmatpush1.msra.mxu0 %v834
        %898 = vmatprep.subr.mxu0 %v845
        %899 = vmatpush1.msra.mxu0 %v844
        %900 = vmatprep.subr.mxu0 %v805
        %901 = vmatpush1.msra.mxu0 %v804
        %902 = vmatprep.subr.mxu0 %v855
        %903 = vmatpush1.msra.mxu0 %v854
        %904 = vmatprep.subr.mxu0 %v865
        %905 = vmatpush1.msra.mxu0 %v864
        %906 = vmatprep.subr.mxu0 %v873
        %907 = vmatpush1.msra.mxu0 %v870
        %908 = vmatprep.subr.mxu0 %v883
        %909 = vmatpush1.msra.mxu0 %v882
        %910 = vmatprep.subr.mxu0 0.0
        %911 = vmatpush1.msra.mxu0 0.0
        %912 = vmatprep.subr.mxu0 0.0
        %913 = vmatpush1.msra.mxu0 0.0
        %914 = vmatprep.subr.mxu0 0.0
        %915 = vmatpush1.msra.mxu0 0.0
        %916 = vmatprep.subr.mxu0 0.0
        %917 = vmatpush1.msra.mxu0 0.0
        %918 = vmatprep.subr.mxu0 0.0
        %919 = vmatpush1.msra.mxu0 0.0
        %920 = vmatprep.subr.mxu0 0.0
        %921 = vmatpush1.msra.mxu0 0.0
        %922 = vmatprep.subr.mxu0 0.0
        %923 = vmatpush1.msra.mxu0 0.0
        %924 = vmatprep.subr.mxu0 0.0
        %925 = vmatpush1.msra.mxu0 0.0
        %926 = vmatprep.subr.mxu0 0.0
        %927 = vmatpush1.msra.mxu0 0.0
        %928 = vmatprep.subr.mxu0 0.0
        %929 = vmatpush1.msra.mxu0 0.0
        %930 = vmatprep.subr.mxu0 0.0
        %931 = vmatpush1.msra.mxu0 0.0
        %932 = vmatprep.subr.mxu0 0.0
        %933 = vmatpush1.msra.mxu0 0.0
        %934 = vmatprep.subr.mxu0 0.0
        %935 = vmatpush1.msra.mxu0 0.0
        %936 = vmatprep.subr.mxu0 0.0
        %937 = vmatpush1.msra.mxu0 0.0
        %938 = vmatprep.subr.mxu0 0.0
        %939 = vmatpush1.msra.mxu0 0.0
        %940 = vmatprep.subr.mxu0 0.0
        %941 = vmatpush1.msra.mxu0 0.0
        %942 = vmatprep.subr.mxu0 0.0
        %943 = vmatpush1.msra.mxu0 0.0
        %944 = vmatprep.subr.mxu0 0.0
        %945 = vmatpush1.msra.mxu0 0.0
        %946 = vmatprep.subr.mxu0 0.0
        %947 = vmatpush1.msra.mxu0 0.0
        %948 = vmatprep.subr.mxu0 0.0
        %949 = vmatpush1.msra.mxu0 0.0
        %950 = vmatprep.subr.mxu0 0.0
        %951 = vmatpush1.msra.mxu0 0.0
        %952 = vmatprep.subr.mxu0 0.0
        %953 = vmatpush1.msra.mxu0 0.0
        %954 = vmatprep.subr.mxu0 0.0
        %955 = vmatpush1.msra.mxu0 0.0
        %956 = vmatprep.mubr.f32.mxu0 0.0
        %957 = vmatmul.mubr.f32.gmra.mrb[0].mxu0 %v890
        %v958 = vpop.f32.mrb[0].mxu0
        %v959 = vadd.f32 %v887, %v958
        %v960 = vpop.f32.mrb[0].mxu0
        %v961 = vadd.f32 %v887, %v960
        %962 = vdwg.mxu0
        %v963 = vmax.f32 %v959, 0.0
        %v964 = vmax.f32 %v961, 0.0
        %967 = vrot.lane.b32.xlu0 %v963, 17
        %v968 = vpop.permute.xlu0 %967
        %969 = vrot.lane.b32.xlu0 %v964, 17
        %v970 = vpop.permute.xlu0 %969
        %v971 = vsel %vm274, %v968, %v970
        %v974 = vsel %vm274, 0.0, %v968
        %v975 = vmul.f32 %v974, %v282
        %v976 = vmul.f32 %v971, %v286
        %977 = vrot.lane.b32.xlu0 %v963, 16
        %v978 = vpop.permute.xlu0 %977
        %979 = vrot.lane.b32.xlu0 %v964, 16
        %v980 = vpop.permute.xlu0 %979
        %v981 = vsel %vm293, %v978, %v980
        %v984 = vsel %vm293, 0.0, %v978
        %985 = vrot.lane.b32.xlu0 %v963, 15
        %v986 = vpop.permute.xlu0 %985
        %987 = vrot.lane.b32.xlu0 %v964, 15
        %v988 = vpop.permute.xlu0 %987
        %v989 = vsel %vm472, %v986, %v988
        %v992 = vsel %vm472, 0.0, %v986
        %v993 = vmul.f32 %v992, %v480
        %v994 = vmul.f32 %v989, %v484
        %995 = vrot.lane.b32.xlu0 %v963, 1
        %v996 = vpop.permute.xlu0 %995
        %997 = vrot.lane.b32.xlu0 %v964, 1
        %v998 = vpop.permute.xlu0 %997
        %v999 = vsel %vm313, %v996, %v998
        %v1002 = vsel %vm313, 0.0, %v996
        %v1003 = vmul.f32 %v1002, %v321
        %v1004 = vmul.f32 %v999, %v325
        %1005 = vrot.lane.b32.xlu0 %v963, 127
        %v1006 = vpop.permute.xlu0 %1005
        %1007 = vrot.lane.b32.xlu0 %v964, 127
        %v1008 = vpop.permute.xlu0 %1007
        %v1009 = vsel %vm501, %v1006, %v1008
        %v1012 = vsel %vm501, %v1008, 0.0
        %v1013 = vmul.f32 %v1009, %v509
        %v1014 = vmul.f32 %v1012, %v513
        %1015 = vrot.lane.b32.xlu0 %v963, 113
        %v1016 = vpop.permute.xlu0 %1015
        %1017 = vrot.lane.b32.xlu0 %v964, 113
        %v1018 = vpop.permute.xlu0 %1017
        %v1019 = vsel %vm520, %v1016, %v1018
        %v1022 = vsel %vm520, %v1018, 0.0
        %v1023 = vmul.f32 %v1019, %v528
        %v1024 = vmul.f32 %v1022, %v532
        %1025 = vrot.lane.b32.xlu0 %v963, 112
        %v1026 = vpop.permute.xlu0 %1025
        %1027 = vrot.lane.b32.xlu0 %v964, 112
        %v1028 = vpop.permute.xlu0 %1027
        %v1029 = vsel %vm539, %v1026, %v1028
        %v1032 = vsel %vm539, %v1028, 0.0
        %1033 = vrot.lane.b32.xlu0 %v963, 111
        %v1034 = vpop.permute.xlu0 %1033
        %1035 = vrot.lane.b32.xlu0 %v964, 111
        %v1036 = vpop.permute.xlu0 %1035
        %v1037 = vsel %vm548, %v1034, %v1036
        %v1040 = vsel %vm548, %v1036, 0.0
        %v1041 = vmul.f32 %v1037, %v556
        %v1042 = vmul.f32 %v1040, %v560
        %1044 = vset.pattern.permute.xlu0 0
        %1045 = vperm.xlu0 %1044, %v447
        %v1046 = vpop.permute.xlu0 %1045
        %v1049 = vsel %vm568, %v443, 0
        %1051 = vmatprep.subr.mxu0 %v976
        %1052 = vmatpush1.msra.mxu0 %v975
        %1053 = vmatprep.subr.mxu0 %v981
        %1054 = vmatpush1.msra.mxu0 %v984
        %1055 = vmatprep.subr.mxu0 %v994
        %1056 = vmatpush1.msra.mxu0 %v993
        %1057 = vmatprep.subr.mxu0 %v1004
        %1058 = vmatpush1.msra.mxu0 %v1003
        %1059 = vmatprep.subr.mxu0 %v964
        %1060 = vmatpush1.msra.mxu0 %v963
        %1061 = vmatprep.subr.mxu0 %v1014
        %1062 = vmatpush1.msra.mxu0 %v1013
        %1063 = vmatprep.subr.mxu0 %v1024
        %1064 = vmatpush1.msra.mxu0 %v1023
        %1065 = vmatprep.subr.mxu0 %v1032
        %1066 = vmatpush1.msra.mxu0 %v1029
        %1067 = vmatprep.subr.mxu0 %v1042
        %1068 = vmatpush1.msra.mxu0 %v1041
        %1069 = vmatprep.subr.mxu0 0.0
        %1070 = vmatpush1.msra.mxu0 0.0
        %1071 = vmatprep.subr.mxu0 0.0
        %1072 = vmatpush1.msra.mxu0 0.0
        %1073 = vmatprep.subr.mxu0 0.0
        %1074 = vmatpush1.msra.mxu0 0.0
        %1075 = vmatprep.subr.mxu0 0.0
        %1076 = vmatpush1.msra.mxu0 0.0
        %1077 = vmatprep.subr.mxu0 0.0
        %1078 = vmatpush1.msra.mxu0 0.0
        %1079 = vmatprep.subr.mxu0 0.0
        %1080 = vmatpush1.msra.mxu0 0.0
        %1081 = vmatprep.subr.mxu0 0.0
        %1082 = vmatpush1.msra.mxu0 0.0
        %1083 = vmatprep.subr.mxu0 0.0
        %1084 = vmatpush1.msra.mxu0 0.0
        %1085 = vmatprep.subr.mxu0 0.0
        %1086 = vmatpush1.msra.mxu0 0.0
        %1087 = vmatprep.subr.mxu0 0.0
        %1088 = vmatpush1.msra.mxu0 0.0
        %1089 = vmatprep.subr.mxu0 0.0
        %1090 = vmatpush1.msra.mxu0 0.0
        %1091 = vmatprep.subr.mxu0 0.0
        %1092 = vmatpush1.msra.mxu0 0.0
        %1093 = vmatprep.subr.mxu0 0.0
        %1094 = vmatpush1.msra.mxu0 0.0
        %1095 = vmatprep.subr.mxu0 0.0
        %1096 = vmatpush1.msra.mxu0 0.0
        %1097 = vmatprep.subr.mxu0 0.0
        %1098 = vmatpush1.msra.mxu0 0.0
        %1099 = vmatprep.subr.mxu0 0.0
        %1100 = vmatpush1.msra.mxu0 0.0
        %1101 = vmatprep.subr.mxu0 0.0
        %1102 = vmatpush1.msra.mxu0 0.0
        %1103 = vmatprep.subr.mxu0 0.0
        %1104 = vmatpush1.msra.mxu0 0.0
        %1105 = vmatprep.subr.mxu0 0.0
        %1106 = vmatpush1.msra.mxu0 0.0
        %1107 = vmatprep.subr.mxu0 0.0
        %1108 = vmatpush1.msra.mxu0 0.0
        %1109 = vmatprep.subr.mxu0 0.0
        %1110 = vmatpush1.msra.mxu0 0.0
        %1111 = vmatprep.subr.mxu0 0.0
        %1112 = vmatpush1.msra.mxu0 0.0
        %1113 = vmatprep.subr.mxu0 0.0
        %1114 = vmatpush1.msra.mxu0 0.0
        %1115 = vmatprep.mubr.f32.mxu0 0.0
        %1116 = vmatmul.mubr.f32.gmra.mrb[0].mxu0 %v1049
        %v1117 = vpop.f32.mrb[0].mxu0
        %v1118 = vadd.f32 %v1046, %v1117
        %v1119 = vpop.f32.mrb[0].mxu0
        %v1120 = vadd.f32 %v1046, %v1119
        %1121 = vdwg.mxu0
        %v1122 = vadd.f32 %v1118, %v804
        %v1123 = vadd.f32 %v1120, %v805
        %v1124 = vmax.f32 %v1122, 0.0
        %v1125 = vmax.f32 %v1123, 0.0
        %1126 = vst [vmem:[%s257] sm:$0xff] %v1124
        %1127 = vst [vmem:[%s257 + $0x8] sm:$0xff] %v1125
        %s1128 = sand.u32 %s141, 1
        %s1129 = scalar_lea.sflag [#allocation4], %s1128
        %s1130 = sand.u32 %s141, 1
        %s1131 = smul.addr %s1130, 16
        %s1132 = scalar_lea.vmem [#allocation7], %s1131
        // Predicated region
        $region49: #{tpu_custom_call.1} parent=39 // pred_check
          %p1133 = pneg %p151
        $region50: #{tpu_custom_call.1} parent=39 // pred_check_branch
          %1135 = sbr.rel (%p1133) target = $region52
        $region51: #{tpu_custom_call.1} parent=39 // pred_region
          %s1137 = ssub.s32 256, 256
          %1138 = vsyncadd %s1129, %s1137
          %s1139 = smul.addr %s23, 2
          %s1140 = smul.addr %s1139, 128
          %s1141 = scalar_lea.hbm %s5, %s1140
          %s1143 = sshll.u32 %s1132, 4
          %s1144 = int_to_ptr.vmem [resolvable:$true] %s1143
          %1146 = dma.vmem_to_hbm [thread:$0]  %s1144, 256, %s1141, %s1129
        $region52: #{tpu_custom_call.1} parent=39 // pred_fallthru
          _
      $region40: #{tpu_custom_call.1} parent=5 // pred_fallthru
        _
      %p1147 = scmp.le.s32.totalorder 2, %s18
      // Predicated region
      $region53: #{tpu_custom_call.1} parent=5 // pred_check
        %p1148 = pneg %p1147
      $region54: #{tpu_custom_call.1} parent=5 // pred_check_branch
        %1150 = sbr.rel (%p1148) target = $region56
      $region55: #{tpu_custom_call.1} parent=5 // pred_region
        %s1151 = ssub.s32 %s18, 2
        // Predicated region
        $region57: #{tpu_custom_call.1} parent=55 // pred_check
          %p1152 = pneg %p157
        $region58: #{tpu_custom_call.1} parent=55 // pred_check_branch
          %1154 = sbr.rel (%p1152) target = $region60
        $region59: #{tpu_custom_call.1} parent=55 // pred_region
          %s1155 = sand.u32 %s142, 1
          %s1156 = scalar_lea.sflag [#allocation4], %s1155
          %s1157 = sand.u32 %s142, 1
          %s1158 = smul.addr %s1157, 16
          %s1159 = scalar_lea.vmem [#allocation7], %s1158
          %1160 = dma.done %s1156, 256
        $region60: #{tpu_custom_call.1} parent=55 // pred_fallthru
          _
      $region56: #{tpu_custom_call.1} parent=5 // pred_fallthru
        _
    $region6: #{tpu_custom_call.1} parent=1 // loop_footer
      %s22 = sadd.s32 1, %s18
    $region7: #{tpu_custom_call.1} parent=1 // loop_footer_branch
      %17 = sbr.rel target = $region3
    $region8: #{tpu_custom_call.1} parent=1 // loop_exit
      _
    %1161 = vsyncpa [#allocation3], 1
    %s1162 = scalar_lea.sflag [#allocation3], 1
    %1163 = vsyncpa %s1162, 1
    %1164 = vsyncpa [#allocation6], 1
    %1165 = vsyncpa [#allocation4], 1
    %s1166 = scalar_lea.sflag [#allocation4], 1
    %1167 = vsyncpa %s1166, 1

</llo_original>
